<compile_context>
chip_gen: v7x
topology: tpu7x:2x2x1
jax: 0.10.0
libtpu: 0.0.40
codegen_flags: <defaults>
</compile_context>

<pallas_src>
import functools

import jax
import jax.numpy as jnp
from jax.experimental import pallas as pl
from jax.experimental.pallas import tpu as pltpu


def _round_up(x, m):
    return (x + m - 1) // m * m


def _cdiv(a, b):
    return -(-a // b)


def _fused_mlp_kernel(*refs, num_layers, d_outs, acts, eps, mxu_dtype):
    """(Linear -> LayerNorm -> ReLU?) x num_layers, fully fused in VMEM.

    refs = (x_ref, w_0, p_0, w_1, p_1, ..., w_{L-1}, p_{L-1}, o_ref)
      x_ref : (tm, dpi_0)      mxu_dtype, features zero-padded per layer-0 width
      w_l   : (dpi_l, dpo_l)   mxu_dtype, zero-padded weights
      p_l   : (8, dpo_l)       f32; row 0 = bias, row 1 = LN gamma, row 2 = LN beta
      o_ref : (tm, dpo_{L-1})  f32
    """
    x_ref = refs[0]
    o_ref = refs[-1]
    h = x_ref[...]                                   # mxu_dtype
    for l in range(num_layers):
        w_ref = refs[1 + 2 * l]
        p_ref = refs[2 + 2 * l]

        # Linear on the MXU (low-precision inputs, f32 accumulation).
        z = jnp.dot(h, w_ref[...], preferred_element_type=jnp.float32)
        z = z + p_ref[0:1, :]                        # + bias

        # LayerNorm over the real d_out features.  Padded output columns of z
        # are exactly 0 (W / bias padding is 0), so full-width sums equal the
        # real sums: no mask needed.
        inv_d = 1.0 / float(d_outs[l])
        mean = jnp.sum(z, axis=-1, keepdims=True) * inv_d
        ex2 = jnp.sum(z * z, axis=-1, keepdims=True) * inv_d
        var = jnp.maximum(ex2 - mean * mean, 0.0)
        y = (z - mean) * jax.lax.rsqrt(var + eps)
        # gamma/beta padding is 0 -> padded columns return to exactly 0, so the
        # zero-column invariant holds for the next layer's statistics.
        y = y * p_ref[1:2, :] + p_ref[2:3, :]

        if acts[l]:
            y = jnp.maximum(y, 0.0)

        if l + 1 < num_layers:
            h = y.astype(mxu_dtype)
        else:
            o_ref[...] = y.astype(o_ref.dtype)


def pack_general_multilayer_params(params, mxu_dtype=jnp.bfloat16, lane=128):
    """Zero-pad each layer's parameters to per-layer lane-dense widths.

    Returns (flat_args, padded_in_dims, padded_out_dims, real_out_dims).
    Callers running many forwards should cache the result of this function.
    """
    flat, dpi, dpo, douts = [], [], [], []
    for (w, b, g, be) in params:
        d_in, d_out = w.shape
        pi, po = _round_up(d_in, lane), _round_up(d_out, lane)
        wp = jnp.zeros((pi, po), mxu_dtype).at[:d_in, :d_out].set(w.astype(mxu_dtype))
        pp = jnp.zeros((8, po), jnp.float32)
        pp = pp.at[0, :d_out].set(b.astype(jnp.float32))
        pp = pp.at[1, :d_out].set(g.astype(jnp.float32))
        pp = pp.at[2, :d_out].set(be.astype(jnp.float32))
        flat += [wp, pp]
        dpi.append(pi)
        dpo.append(po)
        douts.append(d_out)
    return flat, tuple(dpi), tuple(dpo), tuple(douts)


def general_multilayer(x, params, *, final_act=True, eps=1e-5,
                       mxu_dtype=jnp.bfloat16, max_rows_per_tile=1024):
    """Forward of GeneralMultiLayer as a single fused Pallas kernel.

    params: list of (W [d_in, d_out], b [d_out], gamma [d_out], beta [d_out]).
    """
    n, dim_in = x.shape
    num_layers = len(params)
    assert params[0][0].shape[0] == dim_in
    for l in range(1, num_layers):
        assert params[l][0].shape[0] == params[l - 1][0].shape[1]

    # TODO(synk): cache packed params across calls in a real train/infer loop.
    flat, dpi, dpo, douts = pack_general_multilayer_params(params, mxu_dtype)

    # ---------------- VMEM-aware row-tile selection ----------------
    itemsize = jnp.dtype(mxu_dtype).itemsize
    try:
        info = pltpu.get_tpu_info()
        vmem_cap = int(getattr(info, "vmem_capacity_bytes", 64 << 20))
    except Exception:
        vmem_cap = 64 << 20                      # conservative (v7x per-TC size)

    w_bytes = sum(a * b for a, b in zip(dpi, dpo)) * itemsize
    p_bytes = sum(8 * b * 4 for b in dpo)
    max_dp = max(list(dpi) + list(dpo))
    # 2 pipeline buffers for x (mxu_dtype) and out (f32) + f32 working-set headroom.
    row_bytes = 2 * itemsize * dpi[0] + 2 * 4 * dpo[-1] + 6 * 4 * max_dp

    gran = 16                                    # safe for bf16 sublane packing
    budget = int(vmem_cap * 0.7)
    fixed_single = w_bytes + 2 * p_bytes + (1 << 20)
    tm_cap = max(gran, min(max_rows_per_tile,
                           ((budget - fixed_single) // row_bytes) // gran * gran))
    steps = _cdiv(n, tm_cap)
    if steps == 1 and n > gran:
        steps = 2                                # give both v7x TensorCores a step
    tm = _round_up(_cdiv(n, steps), gran)
    steps = _cdiv(n, tm)
    n_pad = steps * tm

    x_p = jnp.zeros((n_pad, dpi[0]), mxu_dtype).at[:n, :dim_in].set(
        x.astype(mxu_dtype))

    acts = tuple(True if l < num_layers - 1 else bool(final_act)
                 for l in range(num_layers))
    kernel = functools.partial(_fused_mlp_kernel, num_layers=num_layers,
                               d_outs=douts, acts=acts, eps=eps,
                               mxu_dtype=mxu_dtype)

    def run(single_buffer_params):
        w_buf = 1 if single_buffer_params else 2
        vmem_limit = int(min(
            max(w_buf * w_bytes + 2 * p_bytes + tm * row_bytes + (4 << 20),
                32 << 20),
            vmem_cap * 0.9))
        pk = dict(pipeline_mode=pl.Buffered(1)) if single_buffer_params else {}
        in_specs = [pl.BlockSpec((tm, dpi[0]), lambda i: (i, 0))]       # x rows
        for l in range(num_layers):
            in_specs.append(pl.BlockSpec((dpi[l], dpo[l]), lambda i: (0, 0), **pk))
            in_specs.append(pl.BlockSpec((8, dpo[l]), lambda i: (0, 0), **pk))
        return pl.pallas_call(
            kernel,
            out_shape=jax.ShapeDtypeStruct((n_pad, dpo[-1]), jnp.float32),
            grid_spec=pltpu.PrefetchScalarGridSpec(
                num_scalar_prefetch=0,
                grid=(steps,),
                in_specs=in_specs,
                out_specs=pl.BlockSpec((tm, dpo[-1]), lambda i: (i, 0)),
            ),
            compiler_params=pltpu.CompilerParams(
                dimension_semantics=("parallel",),
                vmem_limit_bytes=vmem_limit),
        )(x_p, *flat)

    try:
        out = run(True)       # single-buffer the grid-invariant parameter blocks
    except Exception:
        out = run(False)      # fallback if pipeline_mode=Buffered(1) unsupported
    return out[:n, :douts[-1]]


def general_multilayer_ref(x, params, *, final_act=True, eps=1e-5,
                           mxu_dtype=jnp.bfloat16):
    """Pure-JAX reference with matched matmul precision (bf16 in, f32 acc)."""
    num_layers = len(params)
    h = x.astype(jnp.float32)
    for i, (w, b, g, be) in enumerate(params):
        z = jnp.dot(h.astype(mxu_dtype), w.astype(mxu_dtype),
                    preferred_element_type=jnp.float32) + b
        mean = jnp.mean(z, axis=-1, keepdims=True)
        c = z - mean
        var = jnp.mean(c * c, axis=-1, keepdims=True)
        y = c * jax.lax.rsqrt(var + eps) * g + be
        apply_act = final_act if i == num_layers - 1 else True
        if apply_act:
            y = jnp.maximum(y, 0.0)
        h = y
    return h


def init_general_multilayer(key, num_layers, dim_in, dim_out, dim_inner=None):
    """Deterministic synthetic parameters matching GeneralMultiLayer.__init__."""
    dim_inner = dim_in if dim_inner is None else dim_inner
    params = []
    for i in range(num_layers):
        d_in = dim_in if i == 0 else dim_inner
        d_out = dim_out if i == num_layers - 1 else dim_inner
        key, kw, kb = jax.random.split(key, 3)
        w = jax.random.normal(kw, (d_in, d_out), jnp.float32) * (1.0 / jnp.sqrt(d_in))
        b = jax.random.normal(kb, (d_out,), jnp.float32) * 0.01
        gamma = jnp.ones((d_out,), jnp.float32)    # LayerNorm weight init
        beta = jnp.zeros((d_out,), jnp.float32)    # LayerNorm bias init
        params.append((w, b, gamma, beta))
    return params


if __name__ == "__main__":
    # Small shapes consistent with the module: node features [N, dim_in]
    num_layers = 3
    N, dim_in, dim_inner, dim_out = 16, 16, 32, 32

    key = jax.random.PRNGKey(0)
    key, kx = jax.random.split(key)
    x = jax.random.normal(kx, (N, dim_in), jnp.float32)

    params = init_general_multilayer(key, num_layers, dim_in, dim_out, dim_inner)

    out = general_multilayer(x, params, final_act=True)
    out = jax.block_until_ready(out)

    ref = general_multilayer_ref(x, params, final_act=True)

    # sanity: shape, ReLU non-negativity, finiteness, and match vs JAX reference
    assert out.shape == (N, dim_out)
    assert bool(jnp.all(out >= 0.0))
    assert bool(jnp.all(jnp.isfinite(out)))
    max_err = float(jnp.max(jnp.abs(out - ref)))
    assert max_err < 5e-3, f"max abs err vs reference: {max_err}"

    print("KERNEL_OK")
</pallas_src>

<mosaic_0001>
module attributes {stable_mosaic.version = 11 : i64} {
  func.func @_fused_mlp_kernel(%arg0: i32, %arg1: memref<16x128xbf16, #tpu.memory_space<vmem>>, %arg2: memref<128x128xbf16, #tpu.memory_space<vmem>>, %arg3: memref<8x128xf32, #tpu.memory_space<vmem>>, %arg4: memref<128x128xbf16, #tpu.memory_space<vmem>>, %arg5: memref<8x128xf32, #tpu.memory_space<vmem>>, %arg6: memref<128x128xbf16, #tpu.memory_space<vmem>>, %arg7: memref<8x128xf32, #tpu.memory_space<vmem>>, %arg8: memref<16x128xf32, #tpu.memory_space<vmem>>) attributes {dimension_semantics = [#tpu.dimension_semantics<parallel>], iteration_bounds = array<i64: 1>, scalar_prefetch = 0 : i64, scratch_operands = 0 : i64, tpu.core_type = #tpu.core_type<tc>, window_params = [{transform_indices = @transform_0, window_bounds = array<i64: 16, 128>}, {pipeline_mode = #tpu.pipeline_mode<synchronous>, transform_indices = @transform_1, window_bounds = array<i64: 128, 128>}, {pipeline_mode = #tpu.pipeline_mode<synchronous>, transform_indices = @transform_2, window_bounds = array<i64: 8, 128>}, {pipeline_mode = #tpu.pipeline_mode<synchronous>, transform_indices = @transform_3, window_bounds = array<i64: 128, 128>}, {pipeline_mode = #tpu.pipeline_mode<synchronous>, transform_indices = @transform_4, window_bounds = array<i64: 8, 128>}, {pipeline_mode = #tpu.pipeline_mode<synchronous>, transform_indices = @transform_5, window_bounds = array<i64: 128, 128>}, {pipeline_mode = #tpu.pipeline_mode<synchronous>, transform_indices = @transform_6, window_bounds = array<i64: 8, 128>}, {transform_indices = @transform_7, window_bounds = array<i64: 16, 128>}]} {
    %c0 = arith.constant 0 : index
    %c0_0 = arith.constant 0 : index
    %0 = vector.load %arg1[%c0, %c0_0] : memref<16x128xbf16, #tpu.memory_space<vmem>>, vector<16x128xbf16>
    %c0_1 = arith.constant 0 : index
    %c0_2 = arith.constant 0 : index
    %1 = vector.load %arg2[%c0_1, %c0_2] : memref<128x128xbf16, #tpu.memory_space<vmem>>, vector<128x128xbf16>
    %cst = arith.constant dense<0.000000e+00> : vector<16x128xf32>
    %2 = tpu.matmul %0, %1, %cst {dimension_numbers = #tpu.dot_dimension_numbers<[1], [0], [0], [1], [0, 0, 1, 1], [], []>} : vector<16x128xbf16>, vector<128x128xbf16>, vector<16x128xf32> -> vector<16x128xf32>
    %c0_3 = arith.constant 0 : index
    %c0_4 = arith.constant 0 : index
    %3 = vector.load %arg3[%c0_3, %c0_4] : memref<8x128xf32, #tpu.memory_space<vmem>>, vector<1x128xf32>
    %4 = vector.broadcast %3 : vector<1x128xf32> to vector<16x128xf32>
    %5 = arith.addf %2, %4 : vector<16x128xf32>
    %cst_5 = arith.constant dense<0.000000e+00> : vector<16xf32>
    %6 = vector.multi_reduction <add>, %5, %cst_5 [1] : vector<16x128xf32> to vector<16xf32>
    %7 = vector.shape_cast %6 : vector<16xf32> to vector<16x1xf32>
    %cst_6 = arith.constant 3.125000e-02 : f32
    %8 = vector.broadcast %cst_6 : f32 to vector<16x1xf32>
    %9 = arith.mulf %7, %8 : vector<16x1xf32>
    %10 = arith.mulf %5, %5 : vector<16x128xf32>
    %cst_7 = arith.constant dense<0.000000e+00> : vector<16xf32>
    %11 = vector.multi_reduction <add>, %10, %cst_7 [1] : vector<16x128xf32> to vector<16xf32>
    %12 = vector.shape_cast %11 : vector<16xf32> to vector<16x1xf32>
    %cst_8 = arith.constant 3.125000e-02 : f32
    %13 = vector.broadcast %cst_8 : f32 to vector<16x1xf32>
    %14 = arith.mulf %12, %13 : vector<16x1xf32>
    %15 = arith.mulf %9, %9 : vector<16x1xf32>
    %16 = arith.subf %14, %15 : vector<16x1xf32>
    %cst_9 = arith.constant 0.000000e+00 : f32
    %17 = vector.broadcast %cst_9 : f32 to vector<16x1xf32>
    %18 = arith.maximumf %16, %17 : vector<16x1xf32>
    %19 = vector.broadcast %9 : vector<16x1xf32> to vector<16x128xf32>
    %20 = arith.subf %5, %19 : vector<16x128xf32>
    %cst_10 = arith.constant 9.99999974E-6 : f32
    %21 = vector.broadcast %cst_10 : f32 to vector<16x1xf32>
    %22 = arith.addf %18, %21 : vector<16x1xf32>
    %23 = math.rsqrt %22 : vector<16x1xf32>
    %24 = vector.broadcast %23 : vector<16x1xf32> to vector<16x128xf32>
    %25 = arith.mulf %20, %24 : vector<16x128xf32>
    %c1 = arith.constant 1 : index
    %c0_11 = arith.constant 0 : index
    %26 = vector.load %arg3[%c1, %c0_11] : memref<8x128xf32, #tpu.memory_space<vmem>>, vector<1x128xf32>
    %27 = vector.broadcast %26 : vector<1x128xf32> to vector<16x128xf32>
    %28 = arith.mulf %25, %27 : vector<16x128xf32>
    %c2 = arith.constant 2 : index
    %c0_12 = arith.constant 0 : index
    %29 = vector.load %arg3[%c2, %c0_12] : memref<8x128xf32, #tpu.memory_space<vmem>>, vector<1x128xf32>
    %30 = vector.broadcast %29 : vector<1x128xf32> to vector<16x128xf32>
    %31 = arith.addf %28, %30 : vector<16x128xf32>
    %cst_13 = arith.constant 0.000000e+00 : f32
    %32 = vector.broadcast %cst_13 : f32 to vector<16x128xf32>
    %33 = arith.maximumf %31, %32 : vector<16x128xf32>
    %34 = arith.truncf %33 : vector<16x128xf32> to vector<16x128xbf16>
    %c0_14 = arith.constant 0 : index
    %c0_15 = arith.constant 0 : index
    %35 = vector.load %arg4[%c0_14, %c0_15] : memref<128x128xbf16, #tpu.memory_space<vmem>>, vector<128x128xbf16>
    %cst_16 = arith.constant dense<0.000000e+00> : vector<16x128xf32>
    %36 = tpu.matmul %34, %35, %cst_16 {dimension_numbers = #tpu.dot_dimension_numbers<[1], [0], [0], [1], [0, 0, 1, 1], [], []>} : vector<16x128xbf16>, vector<128x128xbf16>, vector<16x128xf32> -> vector<16x128xf32>
    %c0_17 = arith.constant 0 : index
    %c0_18 = arith.constant 0 : index
    %37 = vector.load %arg5[%c0_17, %c0_18] : memref<8x128xf32, #tpu.memory_space<vmem>>, vector<1x128xf32>
    %38 = vector.broadcast %37 : vector<1x128xf32> to vector<16x128xf32>
    %39 = arith.addf %36, %38 : vector<16x128xf32>
    %cst_19 = arith.constant dense<0.000000e+00> : vector<16xf32>
    %40 = vector.multi_reduction <add>, %39, %cst_19 [1] : vector<16x128xf32> to vector<16xf32>
    %41 = vector.shape_cast %40 : vector<16xf32> to vector<16x1xf32>
    %cst_20 = arith.constant 3.125000e-02 : f32
    %42 = vector.broadcast %cst_20 : f32 to vector<16x1xf32>
    %43 = arith.mulf %41, %42 : vector<16x1xf32>
    %44 = arith.mulf %39, %39 : vector<16x128xf32>
    %cst_21 = arith.constant dense<0.000000e+00> : vector<16xf32>
    %45 = vector.multi_reduction <add>, %44, %cst_21 [1] : vector<16x128xf32> to vector<16xf32>
    %46 = vector.shape_cast %45 : vector<16xf32> to vector<16x1xf32>
    %cst_22 = arith.constant 3.125000e-02 : f32
    %47 = vector.broadcast %cst_22 : f32 to vector<16x1xf32>
    %48 = arith.mulf %46, %47 : vector<16x1xf32>
    %49 = arith.mulf %43, %43 : vector<16x1xf32>
    %50 = arith.subf %48, %49 : vector<16x1xf32>
    %cst_23 = arith.constant 0.000000e+00 : f32
    %51 = vector.broadcast %cst_23 : f32 to vector<16x1xf32>
    %52 = arith.maximumf %50, %51 : vector<16x1xf32>
    %53 = vector.broadcast %43 : vector<16x1xf32> to vector<16x128xf32>
    %54 = arith.subf %39, %53 : vector<16x128xf32>
    %cst_24 = arith.constant 9.99999974E-6 : f32
    %55 = vector.broadcast %cst_24 : f32 to vector<16x1xf32>
    %56 = arith.addf %52, %55 : vector<16x1xf32>
    %57 = math.rsqrt %56 : vector<16x1xf32>
    %58 = vector.broadcast %57 : vector<16x1xf32> to vector<16x128xf32>
    %59 = arith.mulf %54, %58 : vector<16x128xf32>
    %c1_25 = arith.constant 1 : index
    %c0_26 = arith.constant 0 : index
    %60 = vector.load %arg5[%c1_25, %c0_26] : memref<8x128xf32, #tpu.memory_space<vmem>>, vector<1x128xf32>
    %61 = vector.broadcast %60 : vector<1x128xf32> to vector<16x128xf32>
    %62 = arith.mulf %59, %61 : vector<16x128xf32>
    %c2_27 = arith.constant 2 : index
    %c0_28 = arith.constant 0 : index
    %63 = vector.load %arg5[%c2_27, %c0_28] : memref<8x128xf32, #tpu.memory_space<vmem>>, vector<1x128xf32>
    %64 = vector.broadcast %63 : vector<1x128xf32> to vector<16x128xf32>
    %65 = arith.addf %62, %64 : vector<16x128xf32>
    %cst_29 = arith.constant 0.000000e+00 : f32
    %66 = vector.broadcast %cst_29 : f32 to vector<16x128xf32>
    %67 = arith.maximumf %65, %66 : vector<16x128xf32>
    %68 = arith.truncf %67 : vector<16x128xf32> to vector<16x128xbf16>
    %c0_30 = arith.constant 0 : index
    %c0_31 = arith.constant 0 : index
    %69 = vector.load %arg6[%c0_30, %c0_31] : memref<128x128xbf16, #tpu.memory_space<vmem>>, vector<128x128xbf16>
    %cst_32 = arith.constant dense<0.000000e+00> : vector<16x128xf32>
    %70 = tpu.matmul %68, %69, %cst_32 {dimension_numbers = #tpu.dot_dimension_numbers<[1], [0], [0], [1], [0, 0, 1, 1], [], []>} : vector<16x128xbf16>, vector<128x128xbf16>, vector<16x128xf32> -> vector<16x128xf32>
    %c0_33 = arith.constant 0 : index
    %c0_34 = arith.constant 0 : index
    %71 = vector.load %arg7[%c0_33, %c0_34] : memref<8x128xf32, #tpu.memory_space<vmem>>, vector<1x128xf32>
    %72 = vector.broadcast %71 : vector<1x128xf32> to vector<16x128xf32>
    %73 = arith.addf %70, %72 : vector<16x128xf32>
    %cst_35 = arith.constant dense<0.000000e+00> : vector<16xf32>
    %74 = vector.multi_reduction <add>, %73, %cst_35 [1] : vector<16x128xf32> to vector<16xf32>
    %75 = vector.shape_cast %74 : vector<16xf32> to vector<16x1xf32>
    %cst_36 = arith.constant 3.125000e-02 : f32
    %76 = vector.broadcast %cst_36 : f32 to vector<16x1xf32>
    %77 = arith.mulf %75, %76 : vector<16x1xf32>
    %78 = arith.mulf %73, %73 : vector<16x128xf32>
    %cst_37 = arith.constant dense<0.000000e+00> : vector<16xf32>
    %79 = vector.multi_reduction <add>, %78, %cst_37 [1] : vector<16x128xf32> to vector<16xf32>
    %80 = vector.shape_cast %79 : vector<16xf32> to vector<16x1xf32>
    %cst_38 = arith.constant 3.125000e-02 : f32
    %81 = vector.broadcast %cst_38 : f32 to vector<16x1xf32>
    %82 = arith.mulf %80, %81 : vector<16x1xf32>
    %83 = arith.mulf %77, %77 : vector<16x1xf32>
    %84 = arith.subf %82, %83 : vector<16x1xf32>
    %cst_39 = arith.constant 0.000000e+00 : f32
    %85 = vector.broadcast %cst_39 : f32 to vector<16x1xf32>
    %86 = arith.maximumf %84, %85 : vector<16x1xf32>
    %87 = vector.broadcast %77 : vector<16x1xf32> to vector<16x128xf32>
    %88 = arith.subf %73, %87 : vector<16x128xf32>
    %cst_40 = arith.constant 9.99999974E-6 : f32
    %89 = vector.broadcast %cst_40 : f32 to vector<16x1xf32>
    %90 = arith.addf %86, %89 : vector<16x1xf32>
    %91 = math.rsqrt %90 : vector<16x1xf32>
    %92 = vector.broadcast %91 : vector<16x1xf32> to vector<16x128xf32>
    %93 = arith.mulf %88, %92 : vector<16x128xf32>
    %c1_41 = arith.constant 1 : index
    %c0_42 = arith.constant 0 : index
    %94 = vector.load %arg7[%c1_41, %c0_42] : memref<8x128xf32, #tpu.memory_space<vmem>>, vector<1x128xf32>
    %95 = vector.broadcast %94 : vector<1x128xf32> to vector<16x128xf32>
    %96 = arith.mulf %93, %95 : vector<16x128xf32>
    %c2_43 = arith.constant 2 : index
    %c0_44 = arith.constant 0 : index
    %97 = vector.load %arg7[%c2_43, %c0_44] : memref<8x128xf32, #tpu.memory_space<vmem>>, vector<1x128xf32>
    %98 = vector.broadcast %97 : vector<1x128xf32> to vector<16x128xf32>
    %99 = arith.addf %96, %98 : vector<16x128xf32>
    %cst_45 = arith.constant 0.000000e+00 : f32
    %100 = vector.broadcast %cst_45 : f32 to vector<16x128xf32>
    %101 = arith.maximumf %99, %100 : vector<16x128xf32>
    %c0_46 = arith.constant 0 : index
    %c0_47 = arith.constant 0 : index
    %102 = vector.load %arg8[%c0_46, %c0_47] : memref<16x128xf32, #tpu.memory_space<vmem>>, vector<16x128xf32>
    tpu.vector_store %arg8[%c0_46, %c0_47], %101 {strides = array<i32>} : memref<16x128xf32, #tpu.memory_space<vmem>>, vector<16x128xf32>,
    return
  }
  func.func @transform_0(%arg0: i32) -> (i32, i32) {
    %c0_i32 = arith.constant 0 : i32
    %c0_i32_0 = arith.constant 0 : i32
    return %arg0, %c0_i32 : i32, i32
  }
  func.func @transform_1(%arg0: i32) -> (i32, i32) {
    %c0_i32 = arith.constant 0 : i32
    %c0_i32_0 = arith.constant 0 : i32
    %c0_i32_1 = arith.constant 0 : i32
    return %c0_i32, %c0_i32_0 : i32, i32
  }
  func.func @transform_2(%arg0: i32) -> (i32, i32) {
    %c0_i32 = arith.constant 0 : i32
    %c0_i32_0 = arith.constant 0 : i32
    %c0_i32_1 = arith.constant 0 : i32
    return %c0_i32, %c0_i32_0 : i32, i32
  }
  func.func @transform_3(%arg0: i32) -> (i32, i32) {
    %c0_i32 = arith.constant 0 : i32
    %c0_i32_0 = arith.constant 0 : i32
    %c0_i32_1 = arith.constant 0 : i32
    return %c0_i32, %c0_i32_0 : i32, i32
  }
  func.func @transform_4(%arg0: i32) -> (i32, i32) {
    %c0_i32 = arith.constant 0 : i32
    %c0_i32_0 = arith.constant 0 : i32
    %c0_i32_1 = arith.constant 0 : i32
    return %c0_i32, %c0_i32_0 : i32, i32
  }
  func.func @transform_5(%arg0: i32) -> (i32, i32) {
    %c0_i32 = arith.constant 0 : i32
    %c0_i32_0 = arith.constant 0 : i32
    %c0_i32_1 = arith.constant 0 : i32
    return %c0_i32, %c0_i32_0 : i32, i32
  }
  func.func @transform_6(%arg0: i32) -> (i32, i32) {
    %c0_i32 = arith.constant 0 : i32
    %c0_i32_0 = arith.constant 0 : i32
    %c0_i32_1 = arith.constant 0 : i32
    return %c0_i32, %c0_i32_0 : i32, i32
  }
  func.func @transform_7(%arg0: i32) -> (i32, i32) {
    %c0_i32 = arith.constant 0 : i32
    %c0_i32_0 = arith.constant 0 : i32
    return %arg0, %c0_i32 : i32, i32
  }
}

module attributes {stable_mosaic.version = 11 : i64} {
  func.func @_fused_mlp_kernel(%arg0: i32, %arg1: memref<16x128xbf16, #tpu.memory_space<vmem>>, %arg2: memref<128x128xbf16, #tpu.memory_space<vmem>>, %arg3: memref<8x128xf32, #tpu.memory_space<vmem>>, %arg4: memref<128x128xbf16, #tpu.memory_space<vmem>>, %arg5: memref<8x128xf32, #tpu.memory_space<vmem>>, %arg6: memref<128x128xbf16, #tpu.memory_space<vmem>>, %arg7: memref<8x128xf32, #tpu.memory_space<vmem>>, %arg8: memref<16x128xf32, #tpu.memory_space<vmem>>) attributes {dimension_semantics = [#tpu.dimension_semantics<parallel>], iteration_bounds = array<i64: 1>, scalar_prefetch = 0 : i64, scratch_operands = 0 : i64, tpu.core_type = #tpu.core_type<tc>, window_params = [{transform_indices = @transform_0, window_bounds = array<i64: 16, 128>}, {pipeline_mode = #tpu.pipeline_mode<synchronous>, transform_indices = @transform_1, window_bounds = array<i64: 128, 128>}, {pipeline_mode = #tpu.pipeline_mode<synchronous>, transform_indices = @transform_2, window_bounds = array<i64: 8, 128>}, {pipeline_mode = #tpu.pipeline_mode<synchronous>, transform_indices = @transform_3, window_bounds = array<i64: 128, 128>}, {pipeline_mode = #tpu.pipeline_mode<synchronous>, transform_indices = @transform_4, window_bounds = array<i64: 8, 128>}, {pipeline_mode = #tpu.pipeline_mode<synchronous>, transform_indices = @transform_5, window_bounds = array<i64: 128, 128>}, {pipeline_mode = #tpu.pipeline_mode<synchronous>, transform_indices = @transform_6, window_bounds = array<i64: 8, 128>}, {transform_indices = @transform_7, window_bounds = array<i64: 16, 128>}]} {
    %c0 = arith.constant 0 : index
    %c0_0 = arith.constant 0 : index
    %0 = vector.load %arg1[%c0, %c0_0] : memref<16x128xbf16, #tpu.memory_space<vmem>>, vector<16x128xbf16>
    %c0_1 = arith.constant 0 : index
    %c0_2 = arith.constant 0 : index
    %1 = vector.load %arg2[%c0_1, %c0_2] : memref<128x128xbf16, #tpu.memory_space<vmem>>, vector<128x128xbf16>
    %cst = arith.constant dense<0.000000e+00> : vector<16x128xf32>
    %2 = tpu.matmul %0, %1, %cst {dimension_numbers = #tpu.dot_dimension_numbers<[1], [0], [0], [1], [0, 0, 1, 1], [], []>} : vector<16x128xbf16>, vector<128x128xbf16>, vector<16x128xf32> -> vector<16x128xf32>
    %c0_3 = arith.constant 0 : index
    %c0_4 = arith.constant 0 : index
    %3 = vector.load %arg3[%c0_3, %c0_4] : memref<8x128xf32, #tpu.memory_space<vmem>>, vector<1x128xf32>
    %4 = vector.broadcast %3 : vector<1x128xf32> to vector<16x128xf32>
    %5 = arith.addf %2, %4 : vector<16x128xf32>
    %cst_5 = arith.constant dense<0.000000e+00> : vector<16xf32>
    %6 = vector.multi_reduction <add>, %5, %cst_5 [1] : vector<16x128xf32> to vector<16xf32>
    %7 = vector.shape_cast %6 : vector<16xf32> to vector<16x1xf32>
    %cst_6 = arith.constant 3.125000e-02 : f32
    %8 = vector.broadcast %cst_6 : f32 to vector<16x1xf32>
    %9 = arith.mulf %7, %8 : vector<16x1xf32>
    %10 = arith.mulf %5, %5 : vector<16x128xf32>
    %cst_7 = arith.constant dense<0.000000e+00> : vector<16xf32>
    %11 = vector.multi_reduction <add>, %10, %cst_7 [1] : vector<16x128xf32> to vector<16xf32>
    %12 = vector.shape_cast %11 : vector<16xf32> to vector<16x1xf32>
    %cst_8 = arith.constant 3.125000e-02 : f32
    %13 = vector.broadcast %cst_8 : f32 to vector<16x1xf32>
    %14 = arith.mulf %12, %13 : vector<16x1xf32>
    %15 = arith.mulf %9, %9 : vector<16x1xf32>
    %16 = arith.subf %14, %15 : vector<16x1xf32>
    %cst_9 = arith.constant 0.000000e+00 : f32
    %17 = vector.broadcast %cst_9 : f32 to vector<16x1xf32>
    %18 = arith.maximumf %16, %17 : vector<16x1xf32>
    %19 = vector.broadcast %9 : vector<16x1xf32> to vector<16x128xf32>
    %20 = arith.subf %5, %19 : vector<16x128xf32>
    %cst_10 = arith.constant 9.99999974E-6 : f32
    %21 = vector.broadcast %cst_10 : f32 to vector<16x1xf32>
    %22 = arith.addf %18, %21 : vector<16x1xf32>
    %23 = math.rsqrt %22 : vector<16x1xf32>
    %24 = vector.broadcast %23 : vector<16x1xf32> to vector<16x128xf32>
    %25 = arith.mulf %20, %24 : vector<16x128xf32>
    %c1 = arith.constant 1 : index
    %c0_11 = arith.constant 0 : index
    %26 = vector.load %arg3[%c1, %c0_11] : memref<8x128xf32, #tpu.memory_space<vmem>>, vector<1x128xf32>
    %27 = vector.broadcast %26 : vector<1x128xf32> to vector<16x128xf32>
    %28 = arith.mulf %25, %27 : vector<16x128xf32>
    %c2 = arith.constant 2 : index
    %c0_12 = arith.constant 0 : index
    %29 = vector.load %arg3[%c2, %c0_12] : memref<8x128xf32, #tpu.memory_space<vmem>>, vector<1x128xf32>
    %30 = vector.broadcast %29 : vector<1x128xf32> to vector<16x128xf32>
    %31 = arith.addf %28, %30 : vector<16x128xf32>
    %cst_13 = arith.constant 0.000000e+00 : f32
    %32 = vector.broadcast %cst_13 : f32 to vector<16x128xf32>
    %33 = arith.maximumf %31, %32 : vector<16x128xf32>
    %34 = arith.truncf %33 : vector<16x128xf32> to vector<16x128xbf16>
    %c0_14 = arith.constant 0 : index
    %c0_15 = arith.constant 0 : index
    %35 = vector.load %arg4[%c0_14, %c0_15] : memref<128x128xbf16, #tpu.memory_space<vmem>>, vector<128x128xbf16>
    %cst_16 = arith.constant dense<0.000000e+00> : vector<16x128xf32>
    %36 = tpu.matmul %34, %35, %cst_16 {dimension_numbers = #tpu.dot_dimension_numbers<[1], [0], [0], [1], [0, 0, 1, 1], [], []>} : vector<16x128xbf16>, vector<128x128xbf16>, vector<16x128xf32> -> vector<16x128xf32>
    %c0_17 = arith.constant 0 : index
    %c0_18 = arith.constant 0 : index
    %37 = vector.load %arg5[%c0_17, %c0_18] : memref<8x128xf32, #tpu.memory_space<vmem>>, vector<1x128xf32>
    %38 = vector.broadcast %37 : vector<1x128xf32> to vector<16x128xf32>
    %39 = arith.addf %36, %38 : vector<16x128xf32>
    %cst_19 = arith.constant dense<0.000000e+00> : vector<16xf32>
    %40 = vector.multi_reduction <add>, %39, %cst_19 [1] : vector<16x128xf32> to vector<16xf32>
    %41 = vector.shape_cast %40 : vector<16xf32> to vector<16x1xf32>
    %cst_20 = arith.constant 3.125000e-02 : f32
    %42 = vector.broadcast %cst_20 : f32 to vector<16x1xf32>
    %43 = arith.mulf %41, %42 : vector<16x1xf32>
    %44 = arith.mulf %39, %39 : vector<16x128xf32>
    %cst_21 = arith.constant dense<0.000000e+00> : vector<16xf32>
    %45 = vector.multi_reduction <add>, %44, %cst_21 [1] : vector<16x128xf32> to vector<16xf32>
    %46 = vector.shape_cast %45 : vector<16xf32> to vector<16x1xf32>
    %cst_22 = arith.constant 3.125000e-02 : f32
    %47 = vector.broadcast %cst_22 : f32 to vector<16x1xf32>
    %48 = arith.mulf %46, %47 : vector<16x1xf32>
    %49 = arith.mulf %43, %43 : vector<16x1xf32>
    %50 = arith.subf %48, %49 : vector<16x1xf32>
    %cst_23 = arith.constant 0.000000e+00 : f32
    %51 = vector.broadcast %cst_23 : f32 to vector<16x1xf32>
    %52 = arith.maximumf %50, %51 : vector<16x1xf32>
    %53 = vector.broadcast %43 : vector<16x1xf32> to vector<16x128xf32>
    %54 = arith.subf %39, %53 : vector<16x128xf32>
    %cst_24 = arith.constant 9.99999974E-6 : f32
    %55 = vector.broadcast %cst_24 : f32 to vector<16x1xf32>
    %56 = arith.addf %52, %55 : vector<16x1xf32>
    %57 = math.rsqrt %56 : vector<16x1xf32>
    %58 = vector.broadcast %57 : vector<16x1xf32> to vector<16x128xf32>
    %59 = arith.mulf %54, %58 : vector<16x128xf32>
    %c1_25 = arith.constant 1 : index
    %c0_26 = arith.constant 0 : index
    %60 = vector.load %arg5[%c1_25, %c0_26] : memref<8x128xf32, #tpu.memory_space<vmem>>, vector<1x128xf32>
    %61 = vector.broadcast %60 : vector<1x128xf32> to vector<16x128xf32>
    %62 = arith.mulf %59, %61 : vector<16x128xf32>
    %c2_27 = arith.constant 2 : index
    %c0_28 = arith.constant 0 : index
    %63 = vector.load %arg5[%c2_27, %c0_28] : memref<8x128xf32, #tpu.memory_space<vmem>>, vector<1x128xf32>
    %64 = vector.broadcast %63 : vector<1x128xf32> to vector<16x128xf32>
    %65 = arith.addf %62, %64 : vector<16x128xf32>
    %cst_29 = arith.constant 0.000000e+00 : f32
    %66 = vector.broadcast %cst_29 : f32 to vector<16x128xf32>
    %67 = arith.maximumf %65, %66 : vector<16x128xf32>
    %68 = arith.truncf %67 : vector<16x128xf32> to vector<16x128xbf16>
    %c0_30 = arith.constant 0 : index
    %c0_31 = arith.constant 0 : index
    %69 = vector.load %arg6[%c0_30, %c0_31] : memref<128x128xbf16, #tpu.memory_space<vmem>>, vector<128x128xbf16>
    %cst_32 = arith.constant dense<0.000000e+00> : vector<16x128xf32>
    %70 = tpu.matmul %68, %69, %cst_32 {dimension_numbers = #tpu.dot_dimension_numbers<[1], [0], [0], [1], [0, 0, 1, 1], [], []>} : vector<16x128xbf16>, vector<128x128xbf16>, vector<16x128xf32> -> vector<16x128xf32>
    %c0_33 = arith.constant 0 : index
    %c0_34 = arith.constant 0 : index
    %71 = vector.load %arg7[%c0_33, %c0_34] : memref<8x128xf32, #tpu.memory_space<vmem>>, vector<1x128xf32>
    %72 = vector.broadcast %71 : vector<1x128xf32> to vector<16x128xf32>
    %73 = arith.addf %70, %72 : vector<16x128xf32>
    %cst_35 = arith.constant dense<0.000000e+00> : vector<16xf32>
    %74 = vector.multi_reduction <add>, %73, %cst_35 [1] : vector<16x128xf32> to vector<16xf32>
    %75 = vector.shape_cast %74 : vector<16xf32> to vector<16x1xf32>
    %cst_36 = arith.constant 3.125000e-02 : f32
    %76 = vector.broadcast %cst_36 : f32 to vector<16x1xf32>
    %77 = arith.mulf %75, %76 : vector<16x1xf32>
    %78 = arith.mulf %73, %73 : vector<16x128xf32>
    %cst_37 = arith.constant dense<0.000000e+00> : vector<16xf32>
    %79 = vector.multi_reduction <add>, %78, %cst_37 [1] : vector<16x128xf32> to vector<16xf32>
    %80 = vector.shape_cast %79 : vector<16xf32> to vector<16x1xf32>
    %cst_38 = arith.constant 3.125000e-02 : f32
    %81 = vector.broadcast %cst_38 : f32 to vector<16x1xf32>
    %82 = arith.mulf %80, %81 : vector<16x1xf32>
    %83 = arith.mulf %77, %77 : vector<16x1xf32>
    %84 = arith.subf %82, %83 : vector<16x1xf32>
    %cst_39 = arith.constant 0.000000e+00 : f32
    %85 = vector.broadcast %cst_39 : f32 to vector<16x1xf32>
    %86 = arith.maximumf %84, %85 : vector<16x1xf32>
    %87 = vector.broadcast %77 : vector<16x1xf32> to vector<16x128xf32>
    %88 = arith.subf %73, %87 : vector<16x128xf32>
    %cst_40 = arith.constant 9.99999974E-6 : f32
    %89 = vector.broadcast %cst_40 : f32 to vector<16x1xf32>
    %90 = arith.addf %86, %89 : vector<16x1xf32>
    %91 = math.rsqrt %90 : vector<16x1xf32>
    %92 = vector.broadcast %91 : vector<16x1xf32> to vector<16x128xf32>
    %93 = arith.mulf %88, %92 : vector<16x128xf32>
    %c1_41 = arith.constant 1 : index
    %c0_42 = arith.constant 0 : index
    %94 = vector.load %arg7[%c1_41, %c0_42] : memref<8x128xf32, #tpu.memory_space<vmem>>, vector<1x128xf32>
    %95 = vector.broadcast %94 : vector<1x128xf32> to vector<16x128xf32>
    %96 = arith.mulf %93, %95 : vector<16x128xf32>
    %c2_43 = arith.constant 2 : index
    %c0_44 = arith.constant 0 : index
    %97 = vector.load %arg7[%c2_43, %c0_44] : memref<8x128xf32, #tpu.memory_space<vmem>>, vector<1x128xf32>
    %98 = vector.broadcast %97 : vector<1x128xf32> to vector<16x128xf32>
    %99 = arith.addf %96, %98 : vector<16x128xf32>
    %cst_45 = arith.constant 0.000000e+00 : f32
    %100 = vector.broadcast %cst_45 : f32 to vector<16x128xf32>
    %101 = arith.maximumf %99, %100 : vector<16x128xf32>
    %c0_46 = arith.constant 0 : index
    %c0_47 = arith.constant 0 : index
    %102 = vector.load %arg8[%c0_46, %c0_47] : memref<16x128xf32, #tpu.memory_space<vmem>>, vector<16x128xf32>
    tpu.vector_store %arg8[%c0_46, %c0_47], %101 {strides = array<i32>} : memref<16x128xf32, #tpu.memory_space<vmem>>, vector<16x128xf32>,
    return
  }
  func.func @transform_0(%arg0: i32) -> (i32, i32) {
    %c0_i32 = arith.constant 0 : i32
    %c0_i32_0 = arith.constant 0 : i32
    return %arg0, %c0_i32 : i32, i32
  }
  func.func @transform_1(%arg0: i32) -> (i32, i32) {
    %c0_i32 = arith.constant 0 : i32
    %c0_i32_0 = arith.constant 0 : i32
    %c0_i32_1 = arith.constant 0 : i32
    return %c0_i32, %c0_i32_0 : i32, i32
  }
  func.func @transform_2(%arg0: i32) -> (i32, i32) {
    %c0_i32 = arith.constant 0 : i32
    %c0_i32_0 = arith.constant 0 : i32
    %c0_i32_1 = arith.constant 0 : i32
    return %c0_i32, %c0_i32_0 : i32, i32
  }
  func.func @transform_3(%arg0: i32) -> (i32, i32) {
    %c0_i32 = arith.constant 0 : i32
    %c0_i32_0 = arith.constant 0 : i32
    %c0_i32_1 = arith.constant 0 : i32
    return %c0_i32, %c0_i32_0 : i32, i32
  }
  func.func @transform_4(%arg0: i32) -> (i32, i32) {
    %c0_i32 = arith.constant 0 : i32
    %c0_i32_0 = arith.constant 0 : i32
    %c0_i32_1 = arith.constant 0 : i32
    return %c0_i32, %c0_i32_0 : i32, i32
  }
  func.func @transform_5(%arg0: i32) -> (i32, i32) {
    %c0_i32 = arith.constant 0 : i32
    %c0_i32_0 = arith.constant 0 : i32
    %c0_i32_1 = arith.constant 0 : i32
    return %c0_i32, %c0_i32_0 : i32, i32
  }
  func.func @transform_6(%arg0: i32) -> (i32, i32) {
    %c0_i32 = arith.constant 0 : i32
    %c0_i32_0 = arith.constant 0 : i32
    %c0_i32_1 = arith.constant 0 : i32
    return %c0_i32, %c0_i32_0 : i32, i32
  }
  func.func @transform_7(%arg0: i32) -> (i32, i32) {
    %c0_i32 = arith.constant 0 : i32
    %c0_i32_0 = arith.constant 0 : i32
    return %arg0, %c0_i32 : i32, i32
  }
}

</mosaic_0001>

<llo_original>
// kernel: tpu_custom_call.1
$region0: #{tpu_custom_call.1}
  #allocation0 [shape = 'u32[]', space=smem, size = 0x4, offset = 0x4, fixed_abs, tag = 'smem constant byte address 0x4 - core index']
  #allocation1 [shape = 'u32[144,128]{1,0:T(1,128)}', space=vmem, size = 0x12000, scoped, tag = 'internal scratch']
  %s0 = inlined_call_operand.hbm [shape: bf16[16,128], index: 0, kind: input, shape index: {}]
  %s1 = inlined_call_operand.hbm [shape: bf16[128,128], index: 1, kind: input, shape index: {}]
  %s2 = inlined_call_operand.hbm [shape: f32[8,128], index: 2, kind: input, shape index: {}]
  %s3 = inlined_call_operand.hbm [shape: bf16[128,128], index: 3, kind: input, shape index: {}]
  %s4 = inlined_call_operand.vmem [shape: f32[8,128], index: 4, kind: input, shape index: {}]
  %s5 = inlined_call_operand.hbm [shape: bf16[128,128], index: 5, kind: input, shape index: {}]
  %s6 = inlined_call_operand.vmem [shape: f32[8,128], index: 6, kind: input, shape index: {}]
  %s7 = inlined_call_operand.hbm [shape: f32[16,128], index: 7, kind: output, shape index: {}]
  %s8 = sld [smem:[#allocation0]]
  $region58: #{tpu_custom_call.1} parent=0
    _
  %s10 = ssub.s32 1, %s8
  %s11 = scalar_select 0, %s10, %s8
  $region1: #{tpu_custom_call.1} parent=0
    #allocation2 [shape = 'u8[4096]{0}', space=vmem, size = 0x1000, scoped, tag = 'input window, operand 0, single buffered']
    #allocation3 [shape = 's32[1]{0}', space=sflag, size = 0x4, scoped, tag = 'scoped memory for tpu_custom_call.1']
    #allocation4 [shape = 's32[1]{0}', space=sflag, size = 0x4, scoped, tag = 'scoped memory for tpu_custom_call.1']
    #allocation5 [shape = 'u8[32768]{0}', space=vmem, size = 0x8000, scoped, tag = 'input window, operand 1, single buffered']
    #allocation6 [shape = 's32[1]{0}', space=sflag, size = 0x4, scoped, tag = 'scoped memory for tpu_custom_call.1']
    #allocation7 [shape = 'u8[4096]{0}', space=vmem, size = 0x1000, scoped, tag = 'input window, operand 2, single buffered']
    #allocation8 [shape = 'u8[32768]{0}', space=vmem, size = 0x8000, scoped, tag = 'input window, operand 3, single buffered']
    #allocation9 [shape = 's32[1]{0}', space=sflag, size = 0x4, scoped, tag = 'scoped memory for tpu_custom_call.1']
    #allocation10 [shape = 'u8[32768]{0}', space=vmem, size = 0x8000, scoped, tag = 'input window, operand 5, single buffered']
    #allocation11 [shape = 'u8[8192]{0}', space=vmem, size = 0x2000, scoped, tag = 'output window, operand 0, single buffered']
    %12 = vsyncpa [#allocation3], 0
    %13 = vsyncpa [#allocation6], 0
    %14 = vsyncpa [#allocation9], 0
    %15 = vsyncpa [#allocation4], 0
    // Predicated region
    $region2: #{tpu_custom_call.1} parent=1 // pred_check
      _
    $region3: #{tpu_custom_call.1} parent=1 // pred_check_branch
      %17 = sbr.rel (0) target = $region5
    $region4: #{tpu_custom_call.1} parent=1 // pred_region
      %s19 = ssub.s32 128, 128
      %20 = vsyncadd [#allocation3], %s19
      %s21 = sshll.u32 [#allocation2], 4
      %s22 = int_to_ptr.vmem [resolvable:$true] %s21
      %27 = dma.hbm_to_vmem [thread:$0]  %s0, 128, %s22, [#allocation3], 64, 64, 4
    $region5: #{tpu_custom_call.1} parent=1 // pred_fallthru
      _
    // Predicated region
    $region6: #{tpu_custom_call.1} parent=1 // pred_check
      _
    $region7: #{tpu_custom_call.1} parent=1 // pred_check_branch
      %29 = sbr.rel (0) target = $region9
    $region8: #{tpu_custom_call.1} parent=1 // pred_region
      %s31 = ssub.s32 1024, 1024
      %32 = vsyncadd [#allocation6], %s31
      %s33 = sshll.u32 [#allocation5], 4
      %s34 = int_to_ptr.vmem [resolvable:$true] %s33
      %39 = dma.hbm_to_vmem [thread:$0]  %s1, 1024, %s34, [#allocation6], 64, 64, 4
    $region9: #{tpu_custom_call.1} parent=1 // pred_fallthru
      _
    // Predicated region
    $region10: #{tpu_custom_call.1} parent=1 // pred_check
      _
    $region11: #{tpu_custom_call.1} parent=1 // pred_check_branch
      %41 = sbr.rel (0) target = $region13
    $region12: #{tpu_custom_call.1} parent=1 // pred_region
      %s43 = ssub.s32 128, 128
      %44 = vsyncadd [#allocation6], %s43
      %s46 = sshll.u32 [#allocation7], 4
      %s47 = int_to_ptr.vmem [resolvable:$true] %s46
      %49 = dma.hbm_to_vmem [thread:$0]  %s2, 128, %s47, [#allocation6]
    $region13: #{tpu_custom_call.1} parent=1 // pred_fallthru
      _
    // Predicated region
    $region14: #{tpu_custom_call.1} parent=1 // pred_check
      _
    $region15: #{tpu_custom_call.1} parent=1 // pred_check_branch
      %51 = sbr.rel (0) target = $region17
    $region16: #{tpu_custom_call.1} parent=1 // pred_region
      %s53 = ssub.s32 1024, 1024
      %54 = vsyncadd [#allocation9], %s53
      %s55 = sshll.u32 [#allocation8], 4
      %s56 = int_to_ptr.vmem [resolvable:$true] %s55
      %61 = dma.hbm_to_vmem [thread:$0]  %s3, 1024, %s56, [#allocation9], 64, 64, 4
    $region17: #{tpu_custom_call.1} parent=1 // pred_fallthru
      _
    // Predicated region
    $region18: #{tpu_custom_call.1} parent=1 // pred_check
      _
    $region19: #{tpu_custom_call.1} parent=1 // pred_check_branch
      %63 = sbr.rel (0) target = $region21
    $region20: #{tpu_custom_call.1} parent=1 // pred_region
      _
    $region21: #{tpu_custom_call.1} parent=1 // pred_fallthru
      _
    // Predicated region
    $region22: #{tpu_custom_call.1} parent=1 // pred_check
      _
    $region23: #{tpu_custom_call.1} parent=1 // pred_check_branch
      %65 = sbr.rel (0) target = $region25
    $region24: #{tpu_custom_call.1} parent=1 // pred_region
      %s67 = ssub.s32 1024, 1024
      %68 = vsyncadd [#allocation9], %s67
      %s69 = sshll.u32 [#allocation10], 4
      %s70 = int_to_ptr.vmem [resolvable:$true] %s69
      %75 = dma.hbm_to_vmem [thread:$0]  %s5, 1024, %s70, [#allocation9], 64, 64, 4
    $region25: #{tpu_custom_call.1} parent=1 // pred_fallthru
      _
    // Predicated region
    $region26: #{tpu_custom_call.1} parent=1 // pred_check
      _
    $region27: #{tpu_custom_call.1} parent=1 // pred_check_branch
      %77 = sbr.rel (0) target = $region29
    $region28: #{tpu_custom_call.1} parent=1 // pred_region
      _
    $region29: #{tpu_custom_call.1} parent=1 // pred_fallthru
      _
    // Predicated region
    $region30: #{tpu_custom_call.1} parent=1 // pred_check
      _
    $region31: #{tpu_custom_call.1} parent=1 // pred_check_branch
      %79 = sbr.rel (0) target = $region33
    $region32: #{tpu_custom_call.1} parent=1 // pred_region
      %80 = dma.done [#allocation3], 128
    $region33: #{tpu_custom_call.1} parent=1 // pred_fallthru
      _
    // Predicated region
    $region34: #{tpu_custom_call.1} parent=1 // pred_check
      _
    $region35: #{tpu_custom_call.1} parent=1 // pred_check_branch
      %82 = sbr.rel (0) target = $region37
    $region36: #{tpu_custom_call.1} parent=1 // pred_region
      %83 = dma.done [#allocation6], 1024
    $region37: #{tpu_custom_call.1} parent=1 // pred_fallthru
      _
    // Predicated region
    $region38: #{tpu_custom_call.1} parent=1 // pred_check
      _
    $region39: #{tpu_custom_call.1} parent=1 // pred_check_branch
      %85 = sbr.rel (0) target = $region41
    $region40: #{tpu_custom_call.1} parent=1 // pred_region
      %86 = dma.done [#allocation6], 128
    $region41: #{tpu_custom_call.1} parent=1 // pred_fallthru
      _
    // Predicated region
    $region42: #{tpu_custom_call.1} parent=1 // pred_check
      _
    $region43: #{tpu_custom_call.1} parent=1 // pred_check_branch
      %88 = sbr.rel (0) target = $region45
    $region44: #{tpu_custom_call.1} parent=1 // pred_region
      %89 = dma.done [#allocation9], 1024
    $region45: #{tpu_custom_call.1} parent=1 // pred_fallthru
      _
    // Predicated region
    $region46: #{tpu_custom_call.1} parent=1 // pred_check
      _
    $region47: #{tpu_custom_call.1} parent=1 // pred_check_branch
      %91 = sbr.rel (0) target = $region49
    $region48: #{tpu_custom_call.1} parent=1 // pred_region
      %92 = dma.done [#allocation9], 1024
    $region49: #{tpu_custom_call.1} parent=1 // pred_fallthru
      _
    %v94 = vld [vmem:[#allocation2] sm:$0xf]
    %v95 = vld [vmem:[#allocation2 + $0x4] sm:$0xf]
    %v96 = vld [vmem:[#allocation5] sm:$0xf]
    %v97 = vld [vmem:[#allocation5 + $0x4] sm:$0xf]
    %v98 = vld [vmem:[#allocation5 + $0x8] sm:$0xf]
    %v99 = vld [vmem:[#allocation5 + $0xc] sm:$0xf]
    %v100 = vld [vmem:[#allocation5 + $0x10] sm:$0xf]
    %v101 = vld [vmem:[#allocation5 + $0x14] sm:$0xf]
    %v102 = vld [vmem:[#allocation5 + $0x18] sm:$0xf]
    %v103 = vld [vmem:[#allocation5 + $0x1c] sm:$0xf]
    %v104 = vld [vmem:[#allocation5 + $0x20] sm:$0xf]
    %v105 = vld [vmem:[#allocation5 + $0x24] sm:$0xf]
    %v106 = vld [vmem:[#allocation5 + $0x28] sm:$0xf]
    %v107 = vld [vmem:[#allocation5 + $0x2c] sm:$0xf]
    %v108 = vld [vmem:[#allocation5 + $0x30] sm:$0xf]
    %v109 = vld [vmem:[#allocation5 + $0x34] sm:$0xf]
    %v110 = vld [vmem:[#allocation5 + $0x38] sm:$0xf]
    %v111 = vld [vmem:[#allocation5 + $0x3c] sm:$0xf]
    %v112 = vld [vmem:[#allocation7] sm:$0x1]
    %v113 = vlaneseq
    %v114 = vshrl.u32 %v113, 7
    %v115 = vsub.s32 0, %v114
    %v116 = vrot.slane %v112, %v115
    %v119 = vunpack.c.l.b16 %v94
    %v120 = vunpack.c.l.b16 %v95
    %v121 = vpack.c.b16 %v120, %v119
    %v139 = vunpack.c.l.b16 %v96
    %v140 = vunpack.c.l.b16 %v97
    %v141 = vunpack.c.l.b16 %v98
    %v142 = vunpack.c.l.b16 %v99
    %v143 = vunpack.c.l.b16 %v100
    %v144 = vunpack.c.l.b16 %v101
    %v145 = vunpack.c.l.b16 %v102
    %v146 = vunpack.c.l.b16 %v103
    %v147 = vunpack.c.l.b16 %v104
    %v148 = vunpack.c.l.b16 %v105
    %v149 = vunpack.c.l.b16 %v106
    %v150 = vunpack.c.l.b16 %v107
    %v151 = vunpack.c.l.b16 %v108
    %v152 = vunpack.c.l.b16 %v109
    %v153 = vunpack.c.l.b16 %v110
    %v154 = vunpack.c.l.b16 %v111
    %v155 = vpack.c.b16 %v140, %v139
    %v156 = vpack.c.b16 %v142, %v141
    %v157 = vpack.c.b16 %v144, %v143
    %v158 = vpack.c.b16 %v146, %v145
    %v159 = vpack.c.b16 %v148, %v147
    %v160 = vpack.c.b16 %v150, %v149
    %v161 = vpack.c.b16 %v152, %v151
    %v162 = vpack.c.b16 %v154, %v153
    %171 = vmatprep.subr.bf16.mxu0 0
    %172 = vmatpush1.bf16.msra.mxu0 %v155
    %173 = vmatprep.subr.bf16.mxu0 0
    %174 = vmatpush1.bf16.msra.mxu0 %v156
    %175 = vmatprep.subr.bf16.mxu0 0
    %176 = vmatpush1.bf16.msra.mxu0 %v157
    %177 = vmatprep.subr.bf16.mxu0 0
    %178 = vmatpush1.bf16.msra.mxu0 %v158
    %179 = vmatprep.subr.bf16.mxu0 0
    %180 = vmatpush1.bf16.msra.mxu0 %v159
    %181 = vmatprep.subr.bf16.mxu0 0
    %182 = vmatpush1.bf16.msra.mxu0 %v160
    %183 = vmatprep.subr.bf16.mxu0 0
    %184 = vmatpush1.bf16.msra.mxu0 %v161
    %185 = vmatprep.subr.bf16.mxu0 0
    %186 = vmatpush1.bf16.msra.mxu0 %v162
    %187 = vmatprep.subr.bf16.mxu0 0
    %188 = vmatpush1.bf16.msra.mxu0 0
    %189 = vmatprep.subr.bf16.mxu0 0
    %190 = vmatpush1.bf16.msra.mxu0 0
    %191 = vmatprep.subr.bf16.mxu0 0
    %192 = vmatpush1.bf16.msra.mxu0 0
    %193 = vmatprep.subr.bf16.mxu0 0
    %194 = vmatpush1.bf16.msra.mxu0 0
    %195 = vmatprep.subr.bf16.mxu0 0
    %196 = vmatpush1.bf16.msra.mxu0 0
    %197 = vmatprep.subr.bf16.mxu0 0
    %198 = vmatpush1.bf16.msra.mxu0 0
    %199 = vmatprep.subr.bf16.mxu0 0
    %200 = vmatpush1.bf16.msra.mxu0 0
    %201 = vmatprep.subr.bf16.mxu0 0
    %202 = vmatpush1.bf16.msra.mxu0 0
    %203 = vmatprep.mubr.bf16.mxu0 0
    %204 = vmatmul.mubr.bf16.gmra.mrb[0].mxu0 %v121
    %v205 = vpop.f32.mrb[0].mxu0
    %v206 = vadd.f32 %v116, %v205
    %v207 = vpop.f32.mrb[0].mxu0
    %v208 = vpop.f32.mrb[0].mxu0
    %v209 = vadd.f32 %v116, %v208
    %v210 = vpop.f32.mrb[0].mxu0
    %211 = vdwg.mxu0
    %212 = vadd.xlane.f32.xlu0 %v206
    %v213 = vpop.xlane.xlu0 %212
    %214 = vadd.xlane.f32.xlu0 %v209
    %v215 = vpop.xlane.xlu0 %214
    %v216 = vmul.f32 %v213, 0.03125
    %v217 = vmul.f32 %v215, 0.03125
    %v218 = vmul.f32 %v206, %v206
    %v219 = vmul.f32 %v209, %v209
    %220 = vadd.xlane.f32.xlu0 %v218
    %v221 = vpop.xlane.xlu0 %220
    %222 = vadd.xlane.f32.xlu0 %v219
    %v223 = vpop.xlane.xlu0 %222
    %v224 = vmul.f32 %v221, 0.03125
    %v225 = vmul.f32 %v223, 0.03125
    %v226 = vmul.f32 %v216, %v216
    %v227 = vmul.f32 %v217, %v217
    %v228 = vsub.f32 %v224, %v226
    %v229 = vsub.f32 %v225, %v227
    %v230 = vmax.f32 %v228, 0.0
    %v231 = vmax.f32 %v229, 0.0
    %v232 = vsub.f32 %v206, %v216
    %v233 = vsub.f32 %v209, %v217
    %v234 = vadd.f32 %v230, 1e-05
    %v235 = vadd.f32 %v231, 1e-05
    %v236 = vrsqrt.pop %v234
    %v237 = vrsqrt.pop %v235
    %v238 = vmul.f32 %v232, %v236
    %v239 = vmul.f32 %v233, %v237
    %v240 = vld [vmem:[#allocation7 + $0x1] sm:$0x1]
    %v241 = vlaneseq
    %v242 = vshrl.u32 %v241, 7
    %v243 = vsub.s32 0, %v242
    %v244 = vrot.slane %v240, %v243
    %v245 = vmul.f32 %v238, %v244
    %v246 = vmul.f32 %v239, %v244
    %v247 = vld [vmem:[#allocation7 + $0x2] sm:$0x1]
    %v248 = vlaneseq
    %v249 = vshrl.u32 %v248, 7
    %v250 = vsub.s32 0, %v249
    %v251 = vrot.slane %v247, %v250
    %v252 = vadd.f32 %v245, %v251
    %v253 = vadd.f32 %v246, %v251
    %v254 = vmax.f32 %v252, 0.0
    %v255 = vmax.f32 %v253, 0.0
    %v256 = vpack.c.bf16 %v255, %v254
    %v257 = vld [vmem:[#allocation8] sm:$0xf]
    %v258 = vld [vmem:[#allocation8 + $0x4] sm:$0xf]
    %v259 = vld [vmem:[#allocation8 + $0x8] sm:$0xf]
    %v260 = vld [vmem:[#allocation8 + $0xc] sm:$0xf]
    %v261 = vld [vmem:[#allocation8 + $0x10] sm:$0xf]
    %v262 = vld [vmem:[#allocation8 + $0x14] sm:$0xf]
    %v263 = vld [vmem:[#allocation8 + $0x18] sm:$0xf]
    %v264 = vld [vmem:[#allocation8 + $0x1c] sm:$0xf]
    %v265 = vld [vmem:[#allocation8 + $0x20] sm:$0xf]
    %v266 = vld [vmem:[#allocation8 + $0x24] sm:$0xf]
    %v267 = vld [vmem:[#allocation8 + $0x28] sm:$0xf]
    %v268 = vld [vmem:[#allocation8 + $0x2c] sm:$0xf]
    %v269 = vld [vmem:[#allocation8 + $0x30] sm:$0xf]
    %v270 = vld [vmem:[#allocation8 + $0x34] sm:$0xf]
    %v271 = vld [vmem:[#allocation8 + $0x38] sm:$0xf]
    %v272 = vld [vmem:[#allocation8 + $0x3c] sm:$0xf]
    %v273 = vld [vmem:[%s4] sm:$0x1]
    %v274 = vlaneseq
    %v275 = vshrl.u32 %v274, 7
    %v276 = vsub.s32 0, %v275
    %v277 = vrot.slane %v273, %v276
    %v294 = vunpack.c.l.b16 %v257
    %v295 = vunpack.c.l.b16 %v258
    %v296 = vunpack.c.l.b16 %v259
    %v297 = vunpack.c.l.b16 %v260
    %v298 = vunpack.c.l.b16 %v261
    %v299 = vunpack.c.l.b16 %v262
    %v300 = vunpack.c.l.b16 %v263
    %v301 = vunpack.c.l.b16 %v264
    %v302 = vunpack.c.l.b16 %v265
    %v303 = vunpack.c.l.b16 %v266
    %v304 = vunpack.c.l.b16 %v267
    %v305 = vunpack.c.l.b16 %v268
    %v306 = vunpack.c.l.b16 %v269
    %v307 = vunpack.c.l.b16 %v270
    %v308 = vunpack.c.l.b16 %v271
    %v309 = vunpack.c.l.b16 %v272
    %v310 = vpack.c.b16 %v295, %v294
    %v311 = vpack.c.b16 %v297, %v296
    %v312 = vpack.c.b16 %v299, %v298
    %v313 = vpack.c.b16 %v301, %v300
    %v314 = vpack.c.b16 %v303, %v302
    %v315 = vpack.c.b16 %v305, %v304
    %v316 = vpack.c.b16 %v307, %v306
    %v317 = vpack.c.b16 %v309, %v308
    %326 = vmatprep.subr.bf16.mxu0 0
    %327 = vmatpush1.bf16.msra.mxu0 %v310
    %328 = vmatprep.subr.bf16.mxu0 0
    %329 = vmatpush1.bf16.msra.mxu0 %v311
    %330 = vmatprep.subr.bf16.mxu0 0
    %331 = vmatpush1.bf16.msra.mxu0 %v312
    %332 = vmatprep.subr.bf16.mxu0 0
    %333 = vmatpush1.bf16.msra.mxu0 %v313
    %334 = vmatprep.subr.bf16.mxu0 0
    %335 = vmatpush1.bf16.msra.mxu0 %v314
    %336 = vmatprep.subr.bf16.mxu0 0
    %337 = vmatpush1.bf16.msra.mxu0 %v315
    %338 = vmatprep.subr.bf16.mxu0 0
    %339 = vmatpush1.bf16.msra.mxu0 %v316
    %340 = vmatprep.subr.bf16.mxu0 0
    %341 = vmatpush1.bf16.msra.mxu0 %v317
    %342 = vmatprep.subr.bf16.mxu0 0
    %343 = vmatpush1.bf16.msra.mxu0 0
    %344 = vmatprep.subr.bf16.mxu0 0
    %345 = vmatpush1.bf16.msra.mxu0 0
    %346 = vmatprep.subr.bf16.mxu0 0
    %347 = vmatpush1.bf16.msra.mxu0 0
    %348 = vmatprep.subr.bf16.mxu0 0
    %349 = vmatpush1.bf16.msra.mxu0 0
    %350 = vmatprep.subr.bf16.mxu0 0
    %351 = vmatpush1.bf16.msra.mxu0 0
    %352 = vmatprep.subr.bf16.mxu0 0
    %353 = vmatpush1.bf16.msra.mxu0 0
    %354 = vmatprep.subr.bf16.mxu0 0
    %355 = vmatpush1.bf16.msra.mxu0 0
    %356 = vmatprep.subr.bf16.mxu0 0
    %357 = vmatpush1.bf16.msra.mxu0 0
    %358 = vmatprep.mubr.bf16.mxu0 0
    %359 = vmatmul.mubr.bf16.gmra.mrb[0].mxu0 %v256
    %v360 = vpop.f32.mrb[0].mxu0
    %v361 = vadd.f32 %v277, %v360
    %v362 = vpop.f32.mrb[0].mxu0
    %v363 = vpop.f32.mrb[0].mxu0
    %v364 = vadd.f32 %v277, %v363
    %v365 = vpop.f32.mrb[0].mxu0
    %366 = vdwg.mxu0
    %367 = vadd.xlane.f32.xlu0 %v361
    %v368 = vpop.xlane.xlu0 %367
    %369 = vadd.xlane.f32.xlu0 %v364
    %v370 = vpop.xlane.xlu0 %369
    %v371 = vmul.f32 %v368, 0.03125
    %v372 = vmul.f32 %v370, 0.03125
    %v373 = vmul.f32 %v361, %v361
    %v374 = vmul.f32 %v364, %v364
    %375 = vadd.xlane.f32.xlu0 %v373
    %v376 = vpop.xlane.xlu0 %375
    %377 = vadd.xlane.f32.xlu0 %v374
    %v378 = vpop.xlane.xlu0 %377
    %v379 = vmul.f32 %v376, 0.03125
    %v380 = vmul.f32 %v378, 0.03125
    %v381 = vmul.f32 %v371, %v371
    %v382 = vmul.f32 %v372, %v372
    %v383 = vsub.f32 %v379, %v381
    %v384 = vsub.f32 %v380, %v382
    %v385 = vmax.f32 %v383, 0.0
    %v386 = vmax.f32 %v384, 0.0
    %v387 = vsub.f32 %v361, %v371
    %v388 = vsub.f32 %v364, %v372
    %v389 = vadd.f32 %v385, 1e-05
    %v390 = vadd.f32 %v386, 1e-05
    %v391 = vrsqrt.pop %v389
    %v392 = vrsqrt.pop %v390
    %v393 = vmul.f32 %v387, %v391
    %v394 = vmul.f32 %v388, %v392
    %v395 = vld [vmem:[%s4 + $0x1] sm:$0x1]
    %v396 = vlaneseq
    %v397 = vshrl.u32 %v396, 7
    %v398 = vsub.s32 0, %v397
    %v399 = vrot.slane %v395, %v398
    %v400 = vmul.f32 %v393, %v399
    %v401 = vmul.f32 %v394, %v399
    %v402 = vld [vmem:[%s4 + $0x2] sm:$0x1]
    %v403 = vlaneseq
    %v404 = vshrl.u32 %v403, 7
    %v405 = vsub.s32 0, %v404
    %v406 = vrot.slane %v402, %v405
    %v407 = vadd.f32 %v400, %v406
    %v408 = vadd.f32 %v401, %v406
    %v409 = vmax.f32 %v407, 0.0
    %v410 = vmax.f32 %v408, 0.0
    %v411 = vpack.c.bf16 %v410, %v409
    %v412 = vld [vmem:[#allocation10] sm:$0xf]
    %v413 = vld [vmem:[#allocation10 + $0x4] sm:$0xf]
    %v414 = vld [vmem:[#allocation10 + $0x8] sm:$0xf]
    %v415 = vld [vmem:[#allocation10 + $0xc] sm:$0xf]
    %v416 = vld [vmem:[#allocation10 + $0x10] sm:$0xf]
    %v417 = vld [vmem:[#allocation10 + $0x14] sm:$0xf]
    %v418 = vld [vmem:[#allocation10 + $0x18] sm:$0xf]
    %v419 = vld [vmem:[#allocation10 + $0x1c] sm:$0xf]
    %v420 = vld [vmem:[#allocation10 + $0x20] sm:$0xf]
    %v421 = vld [vmem:[#allocation10 + $0x24] sm:$0xf]
    %v422 = vld [vmem:[#allocation10 + $0x28] sm:$0xf]
    %v423 = vld [vmem:[#allocation10 + $0x2c] sm:$0xf]
    %v424 = vld [vmem:[#allocation10 + $0x30] sm:$0xf]
    %v425 = vld [vmem:[#allocation10 + $0x34] sm:$0xf]
    %v426 = vld [vmem:[#allocation10 + $0x38] sm:$0xf]
    %v427 = vld [vmem:[#allocation10 + $0x3c] sm:$0xf]
    %v428 = vld [vmem:[%s6] sm:$0x1]
    %v429 = vlaneseq
    %v430 = vshrl.u32 %v429, 7
    %v431 = vsub.s32 0, %v430
    %v432 = vrot.slane %v428, %v431
    %v449 = vunpack.c.l.b16 %v412
    %v450 = vunpack.c.l.b16 %v413
    %v451 = vunpack.c.l.b16 %v414
    %v452 = vunpack.c.l.b16 %v415
    %v453 = vunpack.c.l.b16 %v416
    %v454 = vunpack.c.l.b16 %v417
    %v455 = vunpack.c.l.b16 %v418
    %v456 = vunpack.c.l.b16 %v419
    %v457 = vunpack.c.l.b16 %v420
    %v458 = vunpack.c.l.b16 %v421
    %v459 = vunpack.c.l.b16 %v422
    %v460 = vunpack.c.l.b16 %v423
    %v461 = vunpack.c.l.b16 %v424
    %v462 = vunpack.c.l.b16 %v425
    %v463 = vunpack.c.l.b16 %v426
    %v464 = vunpack.c.l.b16 %v427
    %v465 = vpack.c.b16 %v450, %v449
    %v466 = vpack.c.b16 %v452, %v451
    %v467 = vpack.c.b16 %v454, %v453
    %v468 = vpack.c.b16 %v456, %v455
    %v469 = vpack.c.b16 %v458, %v457
    %v470 = vpack.c.b16 %v460, %v459
    %v471 = vpack.c.b16 %v462, %v461
    %v472 = vpack.c.b16 %v464, %v463
    %481 = vmatprep.subr.bf16.mxu0 0
    %482 = vmatpush1.bf16.msra.mxu0 %v465
    %483 = vmatprep.subr.bf16.mxu0 0
    %484 = vmatpush1.bf16.msra.mxu0 %v466
    %485 = vmatprep.subr.bf16.mxu0 0
    %486 = vmatpush1.bf16.msra.mxu0 %v467
    %487 = vmatprep.subr.bf16.mxu0 0
    %488 = vmatpush1.bf16.msra.mxu0 %v468
    %489 = vmatprep.subr.bf16.mxu0 0
    %490 = vmatpush1.bf16.msra.mxu0 %v469
    %491 = vmatprep.subr.bf16.mxu0 0
    %492 = vmatpush1.bf16.msra.mxu0 %v470
    %493 = vmatprep.subr.bf16.mxu0 0
    %494 = vmatpush1.bf16.msra.mxu0 %v471
    %495 = vmatprep.subr.bf16.mxu0 0
    %496 = vmatpush1.bf16.msra.mxu0 %v472
    %497 = vmatprep.subr.bf16.mxu0 0
    %498 = vmatpush1.bf16.msra.mxu0 0
    %499 = vmatprep.subr.bf16.mxu0 0
    %500 = vmatpush1.bf16.msra.mxu0 0
    %501 = vmatprep.subr.bf16.mxu0 0
    %502 = vmatpush1.bf16.msra.mxu0 0
    %503 = vmatprep.subr.bf16.mxu0 0
    %504 = vmatpush1.bf16.msra.mxu0 0
    %505 = vmatprep.subr.bf16.mxu0 0
    %506 = vmatpush1.bf16.msra.mxu0 0
    %507 = vmatprep.subr.bf16.mxu0 0
    %508 = vmatpush1.bf16.msra.mxu0 0
    %509 = vmatprep.subr.bf16.mxu0 0
    %510 = vmatpush1.bf16.msra.mxu0 0
    %511 = vmatprep.subr.bf16.mxu0 0
    %512 = vmatpush1.bf16.msra.mxu0 0
    %513 = vmatprep.mubr.bf16.mxu0 0
    %514 = vmatmul.mubr.bf16.gmra.mrb[0].mxu0 %v411
    %v515 = vpop.f32.mrb[0].mxu0
    %v516 = vadd.f32 %v432, %v515
    %v517 = vpop.f32.mrb[0].mxu0
    %v518 = vpop.f32.mrb[0].mxu0
    %v519 = vadd.f32 %v432, %v518
    %v520 = vpop.f32.mrb[0].mxu0
    %521 = vdwg.mxu0
    %522 = vadd.xlane.f32.xlu0 %v516
    %v523 = vpop.xlane.xlu0 %522
    %524 = vadd.xlane.f32.xlu0 %v519
    %v525 = vpop.xlane.xlu0 %524
    %v526 = vmul.f32 %v523, 0.03125
    %v527 = vmul.f32 %v525, 0.03125
    %v528 = vmul.f32 %v516, %v516
    %v529 = vmul.f32 %v519, %v519
    %530 = vadd.xlane.f32.xlu0 %v528
    %v531 = vpop.xlane.xlu0 %530
    %532 = vadd.xlane.f32.xlu0 %v529
    %v533 = vpop.xlane.xlu0 %532
    %v534 = vmul.f32 %v531, 0.03125
    %v535 = vmul.f32 %v533, 0.03125
    %v536 = vmul.f32 %v526, %v526
    %v537 = vmul.f32 %v527, %v527
    %v538 = vsub.f32 %v534, %v536
    %v539 = vsub.f32 %v535, %v537
    %v540 = vmax.f32 %v538, 0.0
    %v541 = vmax.f32 %v539, 0.0
    %v542 = vsub.f32 %v516, %v526
    %v543 = vsub.f32 %v519, %v527
    %v544 = vadd.f32 %v540, 1e-05
    %v545 = vadd.f32 %v541, 1e-05
    %v546 = vrsqrt.pop %v544
    %v547 = vrsqrt.pop %v545
    %v548 = vmul.f32 %v542, %v546
    %v549 = vmul.f32 %v543, %v547
    %v550 = vld [vmem:[%s6 + $0x1] sm:$0x1]
    %v551 = vlaneseq
    %v552 = vshrl.u32 %v551, 7
    %v553 = vsub.s32 0, %v552
    %v554 = vrot.slane %v550, %v553
    %v555 = vmul.f32 %v548, %v554
    %v556 = vmul.f32 %v549, %v554
    %v557 = vld [vmem:[%s6 + $0x2] sm:$0x1]
    %v558 = vlaneseq
    %v559 = vshrl.u32 %v558, 7
    %v560 = vsub.s32 0, %v559
    %v561 = vrot.slane %v557, %v560
    %v562 = vadd.f32 %v555, %v561
    %v563 = vadd.f32 %v556, %v561
    %v564 = vmax.f32 %v562, 0.0
    %v565 = vmax.f32 %v563, 0.0
    %566 = vst [vmem:[#allocation11] sm:$0xff] %v564
    %567 = vst [vmem:[#allocation11 + $0x8] sm:$0xff] %v565
    // Predicated region
    $region50: #{tpu_custom_call.1} parent=1 // pred_check
      _
    $region51: #{tpu_custom_call.1} parent=1 // pred_check_branch
      %569 = sbr.rel (0) target = $region53
    $region52: #{tpu_custom_call.1} parent=1 // pred_region
      %s571 = ssub.s32 256, 256
      %572 = vsyncadd [#allocation4], %s571
      %s573 = sshll.u32 [#allocation11], 4
      %s574 = int_to_ptr.vmem [resolvable:$true] %s573
      %579 = dma.vmem_to_hbm [thread:$0]  %s574, 256, %s7, [#allocation4], 128, 128, 8
    $region53: #{tpu_custom_call.1} parent=1 // pred_fallthru
      _
    // Predicated region
    $region54: #{tpu_custom_call.1} parent=1 // pred_check
      _
    $region55: #{tpu_custom_call.1} parent=1 // pred_check_branch
      %581 = sbr.rel (0) target = $region57
    $region56: #{tpu_custom_call.1} parent=1 // pred_region
      %582 = dma.done [#allocation4], 256
    $region57: #{tpu_custom_call.1} parent=1 // pred_fallthru
      _
    %583 = vsyncpa [#allocation3], 1
    %584 = vsyncpa [#allocation6], 1
    %585 = vsyncpa [#allocation9], 1
    %586 = vsyncpa [#allocation4], 1

// kernel: tpu_custom_call.1
$region0: #{tpu_custom_call.1}
  #allocation0 [shape = 'u32[]', space=smem, size = 0x4, offset = 0x4, fixed_abs, tag = 'smem constant byte address 0x4 - core index']
  #allocation1 [shape = 'u32[144,128]{1,0:T(1,128)}', space=vmem, size = 0x12000, scoped, tag = 'internal scratch']
  %s0 = inlined_call_operand.hbm [shape: bf16[16,128], index: 0, kind: input, shape index: {}]
  %s1 = inlined_call_operand.hbm [shape: bf16[128,128], index: 1, kind: input, shape index: {}]
  %s2 = inlined_call_operand.hbm [shape: f32[8,128], index: 2, kind: input, shape index: {}]
  %s3 = inlined_call_operand.hbm [shape: bf16[128,128], index: 3, kind: input, shape index: {}]
  %s4 = inlined_call_operand.vmem [shape: f32[8,128], index: 4, kind: input, shape index: {}]
  %s5 = inlined_call_operand.hbm [shape: bf16[128,128], index: 5, kind: input, shape index: {}]
  %s6 = inlined_call_operand.vmem [shape: f32[8,128], index: 6, kind: input, shape index: {}]
  %s7 = inlined_call_operand.hbm [shape: f32[16,128], index: 7, kind: output, shape index: {}]
  %s8 = sld [smem:[#allocation0]]
  $region58: #{tpu_custom_call.1} parent=0
    _
  %s10 = ssub.s32 1, %s8
  %s11 = scalar_select 0, %s10, %s8
  $region1: #{tpu_custom_call.1} parent=0
    #allocation2 [shape = 'u8[4096]{0}', space=vmem, size = 0x1000, scoped, tag = 'input window, operand 0, single buffered']
    #allocation3 [shape = 's32[1]{0}', space=sflag, size = 0x4, scoped, tag = 'scoped memory for tpu_custom_call.1']
    #allocation4 [shape = 's32[1]{0}', space=sflag, size = 0x4, scoped, tag = 'scoped memory for tpu_custom_call.1']
    #allocation5 [shape = 'u8[32768]{0}', space=vmem, size = 0x8000, scoped, tag = 'input window, operand 1, single buffered']
    #allocation6 [shape = 's32[1]{0}', space=sflag, size = 0x4, scoped, tag = 'scoped memory for tpu_custom_call.1']
    #allocation7 [shape = 'u8[4096]{0}', space=vmem, size = 0x1000, scoped, tag = 'input window, operand 2, single buffered']
    #allocation8 [shape = 'u8[32768]{0}', space=vmem, size = 0x8000, scoped, tag = 'input window, operand 3, single buffered']
    #allocation9 [shape = 's32[1]{0}', space=sflag, size = 0x4, scoped, tag = 'scoped memory for tpu_custom_call.1']
    #allocation10 [shape = 'u8[32768]{0}', space=vmem, size = 0x8000, scoped, tag = 'input window, operand 5, single buffered']
    #allocation11 [shape = 'u8[8192]{0}', space=vmem, size = 0x2000, scoped, tag = 'output window, operand 0, single buffered']
    %12 = vsyncpa [#allocation3], 0
    %13 = vsyncpa [#allocation6], 0
    %14 = vsyncpa [#allocation9], 0
    %15 = vsyncpa [#allocation4], 0
    // Predicated region
    $region2: #{tpu_custom_call.1} parent=1 // pred_check
      _
    $region3: #{tpu_custom_call.1} parent=1 // pred_check_branch
      %17 = sbr.rel (0) target = $region5
    $region4: #{tpu_custom_call.1} parent=1 // pred_region
      %s19 = ssub.s32 128, 128
      %20 = vsyncadd [#allocation3], %s19
      %s21 = sshll.u32 [#allocation2], 4
      %s22 = int_to_ptr.vmem [resolvable:$true] %s21
      %27 = dma.hbm_to_vmem [thread:$0]  %s0, 128, %s22, [#allocation3], 64, 64, 4
    $region5: #{tpu_custom_call.1} parent=1 // pred_fallthru
      _
    // Predicated region
    $region6: #{tpu_custom_call.1} parent=1 // pred_check
      _
    $region7: #{tpu_custom_call.1} parent=1 // pred_check_branch
      %29 = sbr.rel (0) target = $region9
    $region8: #{tpu_custom_call.1} parent=1 // pred_region
      %s31 = ssub.s32 1024, 1024
      %32 = vsyncadd [#allocation6], %s31
      %s33 = sshll.u32 [#allocation5], 4
      %s34 = int_to_ptr.vmem [resolvable:$true] %s33
      %39 = dma.hbm_to_vmem [thread:$0]  %s1, 1024, %s34, [#allocation6], 64, 64, 4
    $region9: #{tpu_custom_call.1} parent=1 // pred_fallthru
      _
    // Predicated region
    $region10: #{tpu_custom_call.1} parent=1 // pred_check
      _
    $region11: #{tpu_custom_call.1} parent=1 // pred_check_branch
      %41 = sbr.rel (0) target = $region13
    $region12: #{tpu_custom_call.1} parent=1 // pred_region
      %s43 = ssub.s32 128, 128
      %44 = vsyncadd [#allocation6], %s43
      %s46 = sshll.u32 [#allocation7], 4
      %s47 = int_to_ptr.vmem [resolvable:$true] %s46
      %49 = dma.hbm_to_vmem [thread:$0]  %s2, 128, %s47, [#allocation6]
    $region13: #{tpu_custom_call.1} parent=1 // pred_fallthru
      _
    // Predicated region
    $region14: #{tpu_custom_call.1} parent=1 // pred_check
      _
    $region15: #{tpu_custom_call.1} parent=1 // pred_check_branch
      %51 = sbr.rel (0) target = $region17
    $region16: #{tpu_custom_call.1} parent=1 // pred_region
      %s53 = ssub.s32 1024, 1024
      %54 = vsyncadd [#allocation9], %s53
      %s55 = sshll.u32 [#allocation8], 4
      %s56 = int_to_ptr.vmem [resolvable:$true] %s55
      %61 = dma.hbm_to_vmem [thread:$0]  %s3, 1024, %s56, [#allocation9], 64, 64, 4
    $region17: #{tpu_custom_call.1} parent=1 // pred_fallthru
      _
    // Predicated region
    $region18: #{tpu_custom_call.1} parent=1 // pred_check
      _
    $region19: #{tpu_custom_call.1} parent=1 // pred_check_branch
      %63 = sbr.rel (0) target = $region21
    $region20: #{tpu_custom_call.1} parent=1 // pred_region
      _
    $region21: #{tpu_custom_call.1} parent=1 // pred_fallthru
      _
    // Predicated region
    $region22: #{tpu_custom_call.1} parent=1 // pred_check
      _
    $region23: #{tpu_custom_call.1} parent=1 // pred_check_branch
      %65 = sbr.rel (0) target = $region25
    $region24: #{tpu_custom_call.1} parent=1 // pred_region
      %s67 = ssub.s32 1024, 1024
      %68 = vsyncadd [#allocation9], %s67
      %s69 = sshll.u32 [#allocation10], 4
      %s70 = int_to_ptr.vmem [resolvable:$true] %s69
      %75 = dma.hbm_to_vmem [thread:$0]  %s5, 1024, %s70, [#allocation9], 64, 64, 4
    $region25: #{tpu_custom_call.1} parent=1 // pred_fallthru
      _
    // Predicated region
    $region26: #{tpu_custom_call.1} parent=1 // pred_check
      _
    $region27: #{tpu_custom_call.1} parent=1 // pred_check_branch
      %77 = sbr.rel (0) target = $region29
    $region28: #{tpu_custom_call.1} parent=1 // pred_region
      _
    $region29: #{tpu_custom_call.1} parent=1 // pred_fallthru
      _
    // Predicated region
    $region30: #{tpu_custom_call.1} parent=1 // pred_check
      _
    $region31: #{tpu_custom_call.1} parent=1 // pred_check_branch
      %79 = sbr.rel (0) target = $region33
    $region32: #{tpu_custom_call.1} parent=1 // pred_region
      %80 = dma.done [#allocation3], 128
    $region33: #{tpu_custom_call.1} parent=1 // pred_fallthru
      _
    // Predicated region
    $region34: #{tpu_custom_call.1} parent=1 // pred_check
      _
    $region35: #{tpu_custom_call.1} parent=1 // pred_check_branch
      %82 = sbr.rel (0) target = $region37
    $region36: #{tpu_custom_call.1} parent=1 // pred_region
      %83 = dma.done [#allocation6], 1024
    $region37: #{tpu_custom_call.1} parent=1 // pred_fallthru
      _
    // Predicated region
    $region38: #{tpu_custom_call.1} parent=1 // pred_check
      _
    $region39: #{tpu_custom_call.1} parent=1 // pred_check_branch
      %85 = sbr.rel (0) target = $region41
    $region40: #{tpu_custom_call.1} parent=1 // pred_region
      %86 = dma.done [#allocation6], 128
    $region41: #{tpu_custom_call.1} parent=1 // pred_fallthru
      _
    // Predicated region
    $region42: #{tpu_custom_call.1} parent=1 // pred_check
      _
    $region43: #{tpu_custom_call.1} parent=1 // pred_check_branch
      %88 = sbr.rel (0) target = $region45
    $region44: #{tpu_custom_call.1} parent=1 // pred_region
      %89 = dma.done [#allocation9], 1024
    $region45: #{tpu_custom_call.1} parent=1 // pred_fallthru
      _
    // Predicated region
    $region46: #{tpu_custom_call.1} parent=1 // pred_check
      _
    $region47: #{tpu_custom_call.1} parent=1 // pred_check_branch
      %91 = sbr.rel (0) target = $region49
    $region48: #{tpu_custom_call.1} parent=1 // pred_region
      %92 = dma.done [#allocation9], 1024
    $region49: #{tpu_custom_call.1} parent=1 // pred_fallthru
      _
    %v94 = vld [vmem:[#allocation2] sm:$0xf]
    %v95 = vld [vmem:[#allocation2 + $0x4] sm:$0xf]
    %v96 = vld [vmem:[#allocation5] sm:$0xf]
    %v97 = vld [vmem:[#allocation5 + $0x4] sm:$0xf]
    %v98 = vld [vmem:[#allocation5 + $0x8] sm:$0xf]
    %v99 = vld [vmem:[#allocation5 + $0xc] sm:$0xf]
    %v100 = vld [vmem:[#allocation5 + $0x10] sm:$0xf]
    %v101 = vld [vmem:[#allocation5 + $0x14] sm:$0xf]
    %v102 = vld [vmem:[#allocation5 + $0x18] sm:$0xf]
    %v103 = vld [vmem:[#allocation5 + $0x1c] sm:$0xf]
    %v104 = vld [vmem:[#allocation5 + $0x20] sm:$0xf]
    %v105 = vld [vmem:[#allocation5 + $0x24] sm:$0xf]
    %v106 = vld [vmem:[#allocation5 + $0x28] sm:$0xf]
    %v107 = vld [vmem:[#allocation5 + $0x2c] sm:$0xf]
    %v108 = vld [vmem:[#allocation5 + $0x30] sm:$0xf]
    %v109 = vld [vmem:[#allocation5 + $0x34] sm:$0xf]
    %v110 = vld [vmem:[#allocation5 + $0x38] sm:$0xf]
    %v111 = vld [vmem:[#allocation5 + $0x3c] sm:$0xf]
    %v112 = vld [vmem:[#allocation7] sm:$0x1]
    %v113 = vlaneseq
    %v114 = vshrl.u32 %v113, 7
    %v115 = vsub.s32 0, %v114
    %v116 = vrot.slane %v112, %v115
    %v119 = vunpack.c.l.b16 %v94
    %v120 = vunpack.c.l.b16 %v95
    %v121 = vpack.c.b16 %v120, %v119
    %v139 = vunpack.c.l.b16 %v96
    %v140 = vunpack.c.l.b16 %v97
    %v141 = vunpack.c.l.b16 %v98
    %v142 = vunpack.c.l.b16 %v99
    %v143 = vunpack.c.l.b16 %v100
    %v144 = vunpack.c.l.b16 %v101
    %v145 = vunpack.c.l.b16 %v102
    %v146 = vunpack.c.l.b16 %v103
    %v147 = vunpack.c.l.b16 %v104
    %v148 = vunpack.c.l.b16 %v105
    %v149 = vunpack.c.l.b16 %v106
    %v150 = vunpack.c.l.b16 %v107
    %v151 = vunpack.c.l.b16 %v108
    %v152 = vunpack.c.l.b16 %v109
    %v153 = vunpack.c.l.b16 %v110
    %v154 = vunpack.c.l.b16 %v111
    %v155 = vpack.c.b16 %v140, %v139
    %v156 = vpack.c.b16 %v142, %v141
    %v157 = vpack.c.b16 %v144, %v143
    %v158 = vpack.c.b16 %v146, %v145
    %v159 = vpack.c.b16 %v148, %v147
    %v160 = vpack.c.b16 %v150, %v149
    %v161 = vpack.c.b16 %v152, %v151
    %v162 = vpack.c.b16 %v154, %v153
    %171 = vmatprep.subr.bf16.mxu0 0
    %172 = vmatpush1.bf16.msra.mxu0 %v155
    %173 = vmatprep.subr.bf16.mxu0 0
    %174 = vmatpush1.bf16.msra.mxu0 %v156
    %175 = vmatprep.subr.bf16.mxu0 0
    %176 = vmatpush1.bf16.msra.mxu0 %v157
    %177 = vmatprep.subr.bf16.mxu0 0
    %178 = vmatpush1.bf16.msra.mxu0 %v158
    %179 = vmatprep.subr.bf16.mxu0 0
    %180 = vmatpush1.bf16.msra.mxu0 %v159
    %181 = vmatprep.subr.bf16.mxu0 0
    %182 = vmatpush1.bf16.msra.mxu0 %v160
    %183 = vmatprep.subr.bf16.mxu0 0
    %184 = vmatpush1.bf16.msra.mxu0 %v161
    %185 = vmatprep.subr.bf16.mxu0 0
    %186 = vmatpush1.bf16.msra.mxu0 %v162
    %187 = vmatprep.subr.bf16.mxu0 0
    %188 = vmatpush1.bf16.msra.mxu0 0
    %189 = vmatprep.subr.bf16.mxu0 0
    %190 = vmatpush1.bf16.msra.mxu0 0
    %191 = vmatprep.subr.bf16.mxu0 0
    %192 = vmatpush1.bf16.msra.mxu0 0
    %193 = vmatprep.subr.bf16.mxu0 0
    %194 = vmatpush1.bf16.msra.mxu0 0
    %195 = vmatprep.subr.bf16.mxu0 0
    %196 = vmatpush1.bf16.msra.mxu0 0
    %197 = vmatprep.subr.bf16.mxu0 0
    %198 = vmatpush1.bf16.msra.mxu0 0
    %199 = vmatprep.subr.bf16.mxu0 0
    %200 = vmatpush1.bf16.msra.mxu0 0
    %201 = vmatprep.subr.bf16.mxu0 0
    %202 = vmatpush1.bf16.msra.mxu0 0
    %203 = vmatprep.mubr.bf16.mxu0 0
    %204 = vmatmul.mubr.bf16.gmra.mrb[0].mxu0 %v121
    %v205 = vpop.f32.mrb[0].mxu0
    %v206 = vadd.f32 %v116, %v205
    %v207 = vpop.f32.mrb[0].mxu0
    %v208 = vpop.f32.mrb[0].mxu0
    %v209 = vadd.f32 %v116, %v208
    %v210 = vpop.f32.mrb[0].mxu0
    %211 = vdwg.mxu0
    %212 = vadd.xlane.f32.xlu0 %v206
    %v213 = vpop.xlane.xlu0 %212
    %214 = vadd.xlane.f32.xlu0 %v209
    %v215 = vpop.xlane.xlu0 %214
    %v216 = vmul.f32 %v213, 0.03125
    %v217 = vmul.f32 %v215, 0.03125
    %v218 = vmul.f32 %v206, %v206
    %v219 = vmul.f32 %v209, %v209
    %220 = vadd.xlane.f32.xlu0 %v218
    %v221 = vpop.xlane.xlu0 %220
    %222 = vadd.xlane.f32.xlu0 %v219
    %v223 = vpop.xlane.xlu0 %222
    %v224 = vmul.f32 %v221, 0.03125
    %v225 = vmul.f32 %v223, 0.03125
    %v226 = vmul.f32 %v216, %v216
    %v227 = vmul.f32 %v217, %v217
    %v228 = vsub.f32 %v224, %v226
    %v229 = vsub.f32 %v225, %v227
    %v230 = vmax.f32 %v228, 0.0
    %v231 = vmax.f32 %v229, 0.0
    %v232 = vsub.f32 %v206, %v216
    %v233 = vsub.f32 %v209, %v217
    %v234 = vadd.f32 %v230, 1e-05
    %v235 = vadd.f32 %v231, 1e-05
    %v236 = vrsqrt.pop %v234
    %v237 = vrsqrt.pop %v235
    %v238 = vmul.f32 %v232, %v236
    %v239 = vmul.f32 %v233, %v237
    %v240 = vld [vmem:[#allocation7 + $0x1] sm:$0x1]
    %v241 = vlaneseq
    %v242 = vshrl.u32 %v241, 7
    %v243 = vsub.s32 0, %v242
    %v244 = vrot.slane %v240, %v243
    %v245 = vmul.f32 %v238, %v244
    %v246 = vmul.f32 %v239, %v244
    %v247 = vld [vmem:[#allocation7 + $0x2] sm:$0x1]
    %v248 = vlaneseq
    %v249 = vshrl.u32 %v248, 7
    %v250 = vsub.s32 0, %v249
    %v251 = vrot.slane %v247, %v250
    %v252 = vadd.f32 %v245, %v251
    %v253 = vadd.f32 %v246, %v251
    %v254 = vmax.f32 %v252, 0.0
    %v255 = vmax.f32 %v253, 0.0
    %v256 = vpack.c.bf16 %v255, %v254
    %v257 = vld [vmem:[#allocation8] sm:$0xf]
    %v258 = vld [vmem:[#allocation8 + $0x4] sm:$0xf]
    %v259 = vld [vmem:[#allocation8 + $0x8] sm:$0xf]
    %v260 = vld [vmem:[#allocation8 + $0xc] sm:$0xf]
    %v261 = vld [vmem:[#allocation8 + $0x10] sm:$0xf]
    %v262 = vld [vmem:[#allocation8 + $0x14] sm:$0xf]
    %v263 = vld [vmem:[#allocation8 + $0x18] sm:$0xf]
    %v264 = vld [vmem:[#allocation8 + $0x1c] sm:$0xf]
    %v265 = vld [vmem:[#allocation8 + $0x20] sm:$0xf]
    %v266 = vld [vmem:[#allocation8 + $0x24] sm:$0xf]
    %v267 = vld [vmem:[#allocation8 + $0x28] sm:$0xf]
    %v268 = vld [vmem:[#allocation8 + $0x2c] sm:$0xf]
    %v269 = vld [vmem:[#allocation8 + $0x30] sm:$0xf]
    %v270 = vld [vmem:[#allocation8 + $0x34] sm:$0xf]
    %v271 = vld [vmem:[#allocation8 + $0x38] sm:$0xf]
    %v272 = vld [vmem:[#allocation8 + $0x3c] sm:$0xf]
    %v273 = vld [vmem:[%s4] sm:$0x1]
    %v274 = vlaneseq
    %v275 = vshrl.u32 %v274, 7
    %v276 = vsub.s32 0, %v275
    %v277 = vrot.slane %v273, %v276
    %v294 = vunpack.c.l.b16 %v257
    %v295 = vunpack.c.l.b16 %v258
    %v296 = vunpack.c.l.b16 %v259
    %v297 = vunpack.c.l.b16 %v260
    %v298 = vunpack.c.l.b16 %v261
    %v299 = vunpack.c.l.b16 %v262
    %v300 = vunpack.c.l.b16 %v263
    %v301 = vunpack.c.l.b16 %v264
    %v302 = vunpack.c.l.b16 %v265
    %v303 = vunpack.c.l.b16 %v266
    %v304 = vunpack.c.l.b16 %v267
    %v305 = vunpack.c.l.b16 %v268
    %v306 = vunpack.c.l.b16 %v269
    %v307 = vunpack.c.l.b16 %v270
    %v308 = vunpack.c.l.b16 %v271
    %v309 = vunpack.c.l.b16 %v272
    %v310 = vpack.c.b16 %v295, %v294
    %v311 = vpack.c.b16 %v297, %v296
    %v312 = vpack.c.b16 %v299, %v298
    %v313 = vpack.c.b16 %v301, %v300
    %v314 = vpack.c.b16 %v303, %v302
    %v315 = vpack.c.b16 %v305, %v304
    %v316 = vpack.c.b16 %v307, %v306
    %v317 = vpack.c.b16 %v309, %v308
    %326 = vmatprep.subr.bf16.mxu0 0
    %327 = vmatpush1.bf16.msra.mxu0 %v310
    %328 = vmatprep.subr.bf16.mxu0 0
    %329 = vmatpush1.bf16.msra.mxu0 %v311
    %330 = vmatprep.subr.bf16.mxu0 0
    %331 = vmatpush1.bf16.msra.mxu0 %v312
    %332 = vmatprep.subr.bf16.mxu0 0
    %333 = vmatpush1.bf16.msra.mxu0 %v313
    %334 = vmatprep.subr.bf16.mxu0 0
    %335 = vmatpush1.bf16.msra.mxu0 %v314
    %336 = vmatprep.subr.bf16.mxu0 0
    %337 = vmatpush1.bf16.msra.mxu0 %v315
    %338 = vmatprep.subr.bf16.mxu0 0
    %339 = vmatpush1.bf16.msra.mxu0 %v316
    %340 = vmatprep.subr.bf16.mxu0 0
    %341 = vmatpush1.bf16.msra.mxu0 %v317
    %342 = vmatprep.subr.bf16.mxu0 0
    %343 = vmatpush1.bf16.msra.mxu0 0
    %344 = vmatprep.subr.bf16.mxu0 0
    %345 = vmatpush1.bf16.msra.mxu0 0
    %346 = vmatprep.subr.bf16.mxu0 0
    %347 = vmatpush1.bf16.msra.mxu0 0
    %348 = vmatprep.subr.bf16.mxu0 0
    %349 = vmatpush1.bf16.msra.mxu0 0
    %350 = vmatprep.subr.bf16.mxu0 0
    %351 = vmatpush1.bf16.msra.mxu0 0
    %352 = vmatprep.subr.bf16.mxu0 0
    %353 = vmatpush1.bf16.msra.mxu0 0
    %354 = vmatprep.subr.bf16.mxu0 0
    %355 = vmatpush1.bf16.msra.mxu0 0
    %356 = vmatprep.subr.bf16.mxu0 0
    %357 = vmatpush1.bf16.msra.mxu0 0
    %358 = vmatprep.mubr.bf16.mxu0 0
    %359 = vmatmul.mubr.bf16.gmra.mrb[0].mxu0 %v256
    %v360 = vpop.f32.mrb[0].mxu0
    %v361 = vadd.f32 %v277, %v360
    %v362 = vpop.f32.mrb[0].mxu0
    %v363 = vpop.f32.mrb[0].mxu0
    %v364 = vadd.f32 %v277, %v363
    %v365 = vpop.f32.mrb[0].mxu0
    %366 = vdwg.mxu0
    %367 = vadd.xlane.f32.xlu0 %v361
    %v368 = vpop.xlane.xlu0 %367
    %369 = vadd.xlane.f32.xlu0 %v364
    %v370 = vpop.xlane.xlu0 %369
    %v371 = vmul.f32 %v368, 0.03125
    %v372 = vmul.f32 %v370, 0.03125
    %v373 = vmul.f32 %v361, %v361
    %v374 = vmul.f32 %v364, %v364
    %375 = vadd.xlane.f32.xlu0 %v373
    %v376 = vpop.xlane.xlu0 %375
    %377 = vadd.xlane.f32.xlu0 %v374
    %v378 = vpop.xlane.xlu0 %377
    %v379 = vmul.f32 %v376, 0.03125
    %v380 = vmul.f32 %v378, 0.03125
    %v381 = vmul.f32 %v371, %v371
    %v382 = vmul.f32 %v372, %v372
    %v383 = vsub.f32 %v379, %v381
    %v384 = vsub.f32 %v380, %v382
    %v385 = vmax.f32 %v383, 0.0
    %v386 = vmax.f32 %v384, 0.0
    %v387 = vsub.f32 %v361, %v371
    %v388 = vsub.f32 %v364, %v372
    %v389 = vadd.f32 %v385, 1e-05
    %v390 = vadd.f32 %v386, 1e-05
    %v391 = vrsqrt.pop %v389
    %v392 = vrsqrt.pop %v390
    %v393 = vmul.f32 %v387, %v391
    %v394 = vmul.f32 %v388, %v392
    %v395 = vld [vmem:[%s4 + $0x1] sm:$0x1]
    %v396 = vlaneseq
    %v397 = vshrl.u32 %v396, 7
    %v398 = vsub.s32 0, %v397
    %v399 = vrot.slane %v395, %v398
    %v400 = vmul.f32 %v393, %v399
    %v401 = vmul.f32 %v394, %v399
    %v402 = vld [vmem:[%s4 + $0x2] sm:$0x1]
    %v403 = vlaneseq
    %v404 = vshrl.u32 %v403, 7
    %v405 = vsub.s32 0, %v404
    %v406 = vrot.slane %v402, %v405
    %v407 = vadd.f32 %v400, %v406
    %v408 = vadd.f32 %v401, %v406
    %v409 = vmax.f32 %v407, 0.0
    %v410 = vmax.f32 %v408, 0.0
    %v411 = vpack.c.bf16 %v410, %v409
    %v412 = vld [vmem:[#allocation10] sm:$0xf]
    %v413 = vld [vmem:[#allocation10 + $0x4] sm:$0xf]
    %v414 = vld [vmem:[#allocation10 + $0x8] sm:$0xf]
    %v415 = vld [vmem:[#allocation10 + $0xc] sm:$0xf]
    %v416 = vld [vmem:[#allocation10 + $0x10] sm:$0xf]
    %v417 = vld [vmem:[#allocation10 + $0x14] sm:$0xf]
    %v418 = vld [vmem:[#allocation10 + $0x18] sm:$0xf]
    %v419 = vld [vmem:[#allocation10 + $0x1c] sm:$0xf]
    %v420 = vld [vmem:[#allocation10 + $0x20] sm:$0xf]
    %v421 = vld [vmem:[#allocation10 + $0x24] sm:$0xf]
    %v422 = vld [vmem:[#allocation10 + $0x28] sm:$0xf]
    %v423 = vld [vmem:[#allocation10 + $0x2c] sm:$0xf]
    %v424 = vld [vmem:[#allocation10 + $0x30] sm:$0xf]
    %v425 = vld [vmem:[#allocation10 + $0x34] sm:$0xf]
    %v426 = vld [vmem:[#allocation10 + $0x38] sm:$0xf]
    %v427 = vld [vmem:[#allocation10 + $0x3c] sm:$0xf]
    %v428 = vld [vmem:[%s6] sm:$0x1]
    %v429 = vlaneseq
    %v430 = vshrl.u32 %v429, 7
    %v431 = vsub.s32 0, %v430
    %v432 = vrot.slane %v428, %v431
    %v449 = vunpack.c.l.b16 %v412
    %v450 = vunpack.c.l.b16 %v413
    %v451 = vunpack.c.l.b16 %v414
    %v452 = vunpack.c.l.b16 %v415
    %v453 = vunpack.c.l.b16 %v416
    %v454 = vunpack.c.l.b16 %v417
    %v455 = vunpack.c.l.b16 %v418
    %v456 = vunpack.c.l.b16 %v419
    %v457 = vunpack.c.l.b16 %v420
    %v458 = vunpack.c.l.b16 %v421
    %v459 = vunpack.c.l.b16 %v422
    %v460 = vunpack.c.l.b16 %v423
    %v461 = vunpack.c.l.b16 %v424
    %v462 = vunpack.c.l.b16 %v425
    %v463 = vunpack.c.l.b16 %v426
    %v464 = vunpack.c.l.b16 %v427
    %v465 = vpack.c.b16 %v450, %v449
    %v466 = vpack.c.b16 %v452, %v451
    %v467 = vpack.c.b16 %v454, %v453
    %v468 = vpack.c.b16 %v456, %v455
    %v469 = vpack.c.b16 %v458, %v457
    %v470 = vpack.c.b16 %v460, %v459
    %v471 = vpack.c.b16 %v462, %v461
    %v472 = vpack.c.b16 %v464, %v463
    %481 = vmatprep.subr.bf16.mxu0 0
    %482 = vmatpush1.bf16.msra.mxu0 %v465
    %483 = vmatprep.subr.bf16.mxu0 0
    %484 = vmatpush1.bf16.msra.mxu0 %v466
    %485 = vmatprep.subr.bf16.mxu0 0
    %486 = vmatpush1.bf16.msra.mxu0 %v467
    %487 = vmatprep.subr.bf16.mxu0 0
    %488 = vmatpush1.bf16.msra.mxu0 %v468
    %489 = vmatprep.subr.bf16.mxu0 0
    %490 = vmatpush1.bf16.msra.mxu0 %v469
    %491 = vmatprep.subr.bf16.mxu0 0
    %492 = vmatpush1.bf16.msra.mxu0 %v470
    %493 = vmatprep.subr.bf16.mxu0 0
    %494 = vmatpush1.bf16.msra.mxu0 %v471
    %495 = vmatprep.subr.bf16.mxu0 0
    %496 = vmatpush1.bf16.msra.mxu0 %v472
    %497 = vmatprep.subr.bf16.mxu0 0
    %498 = vmatpush1.bf16.msra.mxu0 0
    %499 = vmatprep.subr.bf16.mxu0 0
    %500 = vmatpush1.bf16.msra.mxu0 0
    %501 = vmatprep.subr.bf16.mxu0 0
    %502 = vmatpush1.bf16.msra.mxu0 0
    %503 = vmatprep.subr.bf16.mxu0 0
    %504 = vmatpush1.bf16.msra.mxu0 0
    %505 = vmatprep.subr.bf16.mxu0 0
    %506 = vmatpush1.bf16.msra.mxu0 0
    %507 = vmatprep.subr.bf16.mxu0 0
    %508 = vmatpush1.bf16.msra.mxu0 0
    %509 = vmatprep.subr.bf16.mxu0 0
    %510 = vmatpush1.bf16.msra.mxu0 0
    %511 = vmatprep.subr.bf16.mxu0 0
    %512 = vmatpush1.bf16.msra.mxu0 0
    %513 = vmatprep.mubr.bf16.mxu0 0
    %514 = vmatmul.mubr.bf16.gmra.mrb[0].mxu0 %v411
    %v515 = vpop.f32.mrb[0].mxu0
    %v516 = vadd.f32 %v432, %v515
    %v517 = vpop.f32.mrb[0].mxu0
    %v518 = vpop.f32.mrb[0].mxu0
    %v519 = vadd.f32 %v432, %v518
    %v520 = vpop.f32.mrb[0].mxu0
    %521 = vdwg.mxu0
    %522 = vadd.xlane.f32.xlu0 %v516
    %v523 = vpop.xlane.xlu0 %522
    %524 = vadd.xlane.f32.xlu0 %v519
    %v525 = vpop.xlane.xlu0 %524
    %v526 = vmul.f32 %v523, 0.03125
    %v527 = vmul.f32 %v525, 0.03125
    %v528 = vmul.f32 %v516, %v516
    %v529 = vmul.f32 %v519, %v519
    %530 = vadd.xlane.f32.xlu0 %v528
    %v531 = vpop.xlane.xlu0 %530
    %532 = vadd.xlane.f32.xlu0 %v529
    %v533 = vpop.xlane.xlu0 %532
    %v534 = vmul.f32 %v531, 0.03125
    %v535 = vmul.f32 %v533, 0.03125
    %v536 = vmul.f32 %v526, %v526
    %v537 = vmul.f32 %v527, %v527
    %v538 = vsub.f32 %v534, %v536
    %v539 = vsub.f32 %v535, %v537
    %v540 = vmax.f32 %v538, 0.0
    %v541 = vmax.f32 %v539, 0.0
    %v542 = vsub.f32 %v516, %v526
    %v543 = vsub.f32 %v519, %v527
    %v544 = vadd.f32 %v540, 1e-05
    %v545 = vadd.f32 %v541, 1e-05
    %v546 = vrsqrt.pop %v544
    %v547 = vrsqrt.pop %v545
    %v548 = vmul.f32 %v542, %v546
    %v549 = vmul.f32 %v543, %v547
    %v550 = vld [vmem:[%s6 + $0x1] sm:$0x1]
    %v551 = vlaneseq
    %v552 = vshrl.u32 %v551, 7
    %v553 = vsub.s32 0, %v552
    %v554 = vrot.slane %v550, %v553
    %v555 = vmul.f32 %v548, %v554
    %v556 = vmul.f32 %v549, %v554
    %v557 = vld [vmem:[%s6 + $0x2] sm:$0x1]
    %v558 = vlaneseq
    %v559 = vshrl.u32 %v558, 7
    %v560 = vsub.s32 0, %v559
    %v561 = vrot.slane %v557, %v560
    %v562 = vadd.f32 %v555, %v561
    %v563 = vadd.f32 %v556, %v561
    %v564 = vmax.f32 %v562, 0.0
    %v565 = vmax.f32 %v563, 0.0
    %566 = vst [vmem:[#allocation11] sm:$0xff] %v564
    %567 = vst [vmem:[#allocation11 + $0x8] sm:$0xff] %v565
    // Predicated region
    $region50: #{tpu_custom_call.1} parent=1 // pred_check
      _
    $region51: #{tpu_custom_call.1} parent=1 // pred_check_branch
      %569 = sbr.rel (0) target = $region53
    $region52: #{tpu_custom_call.1} parent=1 // pred_region
      %s571 = ssub.s32 256, 256
      %572 = vsyncadd [#allocation4], %s571
      %s573 = sshll.u32 [#allocation11], 4
      %s574 = int_to_ptr.vmem [resolvable:$true] %s573
      %579 = dma.vmem_to_hbm [thread:$0]  %s574, 256, %s7, [#allocation4], 128, 128, 8
    $region53: #{tpu_custom_call.1} parent=1 // pred_fallthru
      _
    // Predicated region
    $region54: #{tpu_custom_call.1} parent=1 // pred_check
      _
    $region55: #{tpu_custom_call.1} parent=1 // pred_check_branch
      %581 = sbr.rel (0) target = $region57
    $region56: #{tpu_custom_call.1} parent=1 // pred_region
      %582 = dma.done [#allocation4], 256
    $region57: #{tpu_custom_call.1} parent=1 // pred_fallthru
      _
    %583 = vsyncpa [#allocation3], 1
    %584 = vsyncpa [#allocation6], 1
    %585 = vsyncpa [#allocation9], 1
    %586 = vsyncpa [#allocation4], 1

</llo_original>
